<compile_context>
chip_gen: v5e
topology: v5e:2x2
jax: 0.10.0
libtpu: 0.0.40
codegen_flags: <defaults>
</compile_context>

<pallas_src>
import functools

import jax
import jax.numpy as jnp
from jax.experimental import pallas as pl
from jax.experimental.pallas import tpu as pltpu

EPS = 1e-12


# ----------------------------------------------------------------------------
# Pallas kernels
# ----------------------------------------------------------------------------
def _cln_kernel(x_ref, g_ref, bt_ref, o_ref, carry_ref, *, eps, tt, T, C):
    """Cumulative LayerNorm over channels, cumulative along (tiled) time.

    Block: x (1, tt, C) channel-last for one batch element / one time tile.
    Running cum_sum / cum_sq are carried across time tiles in VMEM scratch;
    within a tile a single lower-triangular (tt,tt)@(tt,2) matmul builds both
    cumulative statistics at once.
    """
    t = pl.program_id(1)

    @pl.when(t == 0)
    def _():
        carry_ref[...] = jnp.zeros_like(carry_ref)

    x = x_ref[0]                                              # (tt, C)

    # Mask rows past the true sequence length (boundary grid block).
    local = jax.lax.broadcasted_iota(jnp.int32, (tt, 1), 0)   # (tt, 1)
    valid = (t * tt + local) < T
    xv = jnp.where(valid, x, 0.0)

    ssum = jnp.sum(xv, axis=1, keepdims=True)                 # (tt, 1)
    ssq = jnp.sum(xv * xv, axis=1, keepdims=True)             # (tt, 1)
    s = jnp.concatenate([ssum, ssq], axis=1)                  # (tt, 2)

    row = jax.lax.broadcasted_iota(jnp.int32, (tt, tt), 0)
    col = jax.lax.broadcasted_iota(jnp.int32, (tt, tt), 1)
    tri = (col <= row).astype(jnp.float32)                    # lower-tri incl diag
    cum = jnp.dot(tri, s, preferred_element_type=jnp.float32)  # (tt, 2)

    carry = carry_ref[...]                                    # (1, 2)
    cum = cum + carry
    carry_ref[...] = carry + jnp.sum(s, axis=0, keepdims=True)

    pos = (local + t * tt + 1).astype(jnp.float32)            # 1-indexed global pos
    cum_num = pos * C                                         # (tt, 1)
    cum_sum = cum[:, 0:1]
    cum_sq = cum[:, 1:2]
    cum_mean = cum_sum / cum_num
    cum_var = jnp.maximum(cum_sq / cum_num - cum_mean * cum_mean, 0.0)

    y = (xv - cum_mean) / (jnp.sqrt(cum_var) + eps) * g_ref[...] + bt_ref[...]
    o_ref[0] = y.astype(o_ref.dtype)


def _linear_kernel(x_ref, w_ref, b_ref, o_ref):
    """y = x @ W + b on a (tm, Cin) row-tile."""
    y = jnp.dot(x_ref[...], w_ref[...],
                preferred_element_type=jnp.float32) + b_ref[...]
    o_ref[...] = y.astype(o_ref.dtype)


def _linear2_kernel(x_ref, w1_ref, b1_ref, w2_ref, b2_ref, o_ref, *, mid_act):
    """y = (act1(x @ W1 + b1)) @ W2 + b2 for a (tm, Cin) row-tile (fused)."""
    x = x_ref[...]
    h = jnp.dot(x, w1_ref[...], preferred_element_type=jnp.float32) + b1_ref[...]
    if mid_act == "sigmoid":
        h = jax.nn.sigmoid(h)
    y = jnp.dot(h, w2_ref[...], preferred_element_type=jnp.float32) + b2_ref[...]
    o_ref[...] = y.astype(o_ref.dtype)


def _gtu_kernel(alpha_ref, x_ref, w_ref, b_ref, o_ref, *, f_out):
    """Fused PReLU -> GTU1d (single concatenated 1x1 conv, tanh*sigmoid) -> ReLU."""
    x = x_ref[...]
    alpha = alpha_ref[0]                                      # SMEM scalar
    xp = jnp.where(x >= 0.0, x, alpha * x)                    # PReLU
    z = jnp.dot(xp, w_ref[...], preferred_element_type=jnp.float32) + b_ref[...]
    zm = z[:, :f_out]
    zg = z[:, f_out:]
    y = jnp.tanh(zm) * jax.nn.sigmoid(zg)                     # GTU
    o_ref[...] = jnp.maximum(y, 0.0).astype(o_ref.dtype)      # mask_nonlinear=relu


# ----------------------------------------------------------------------------
# Pallas wrappers
# ----------------------------------------------------------------------------
def _pick_tile(m, target=512):
    """Full-extent block if it fits; otherwise a 512-row (8-aligned) tile."""
    return m if m <= target else target


def cln_chlast(x, gamma, beta, eps=EPS, tt_cap=512):
    """Cumulative LayerNorm on channel-last (B, T, C) input."""
    B, T, C = x.shape
    tt = T if T <= tt_cap else tt_cap          # tt_cap is a multiple of 8
    nt = pl.cdiv(T, tt)
    return pl.pallas_call(
        functools.partial(_cln_kernel, eps=eps, tt=tt, T=T, C=C),
        grid=(B, nt),
        in_specs=[
            pl.BlockSpec((1, tt, C), lambda b, t: (b, t, 0)),
            pl.BlockSpec((1, C), lambda b, t: (0, 0)),
            pl.BlockSpec((1, C), lambda b, t: (0, 0)),
        ],
        out_specs=pl.BlockSpec((1, tt, C), lambda b, t: (b, t, 0)),
        out_shape=jax.ShapeDtypeStruct((B, T, C), jnp.float32),
        scratch_shapes=[pltpu.VMEM((1, 2), jnp.float32)],
        compiler_params=pltpu.CompilerParams(
            dimension_semantics=("parallel", "arbitrary")),
    )(x, gamma.reshape(1, C), beta.reshape(1, C))


def linear_rows(x2d, w, b, tm=512):
    """x2d @ W + b on (M, Cin) rows."""
    M, cin = x2d.shape
    cout = w.shape[1]
    tm = _pick_tile(M, tm)
    return pl.pallas_call(
        _linear_kernel,
        grid=(pl.cdiv(M, tm),),
        in_specs=[
            pl.BlockSpec((tm, cin), lambda i: (i, 0)),
            pl.BlockSpec((cin, cout), lambda i: (0, 0)),
            pl.BlockSpec((1, cout), lambda i: (0, 0)),
        ],
        out_specs=pl.BlockSpec((tm, cout), lambda i: (i, 0)),
        out_shape=jax.ShapeDtypeStruct((M, cout), jnp.float32),
        compiler_params=pltpu.CompilerParams(dimension_semantics=("parallel",)),
    )(x2d, w, b.reshape(1, cout))


def fused_linear2(x2d, w1, b1, w2, b2, mid_act="none", tm=512):
    """(act1(x2d @ W1 + b1)) @ W2 + b2 on (M, Cin) rows, fused in one kernel."""
    M, cin = x2d.shape
    cmid = w1.shape[1]
    cout = w2.shape[1]
    tm = _pick_tile(M, tm)
    return pl.pallas_call(
        functools.partial(_linear2_kernel, mid_act=mid_act),
        grid=(pl.cdiv(M, tm),),
        in_specs=[
            pl.BlockSpec((tm, cin), lambda i: (i, 0)),
            pl.BlockSpec((cin, cmid), lambda i: (0, 0)),
            pl.BlockSpec((1, cmid), lambda i: (0, 0)),
            pl.BlockSpec((cmid, cout), lambda i: (0, 0)),
            pl.BlockSpec((1, cout), lambda i: (0, 0)),
        ],
        out_specs=pl.BlockSpec((tm, cout), lambda i: (i, 0)),
        out_shape=jax.ShapeDtypeStruct((M, cout), jnp.float32),
        compiler_params=pltpu.CompilerParams(dimension_semantics=("parallel",)),
    )(x2d, w1, b1.reshape(1, cmid), w2, b2.reshape(1, cout))


def prelu_gtu_relu(x2d, w_cat, b_cat, alpha, tm=512):
    """Fused PReLU + GTU1d(1x1, map|gate concatenated) + ReLU on (M, F) rows."""
    M, f_in = x2d.shape
    f_out = w_cat.shape[1] // 2
    tm = _pick_tile(M, tm)
    return pl.pallas_call(
        functools.partial(_gtu_kernel, f_out=f_out),
        grid=(pl.cdiv(M, tm),),
        in_specs=[
            pl.BlockSpec(memory_space=pltpu.MemorySpace.SMEM),   # alpha scalar
            pl.BlockSpec((tm, f_in), lambda i: (i, 0)),
            pl.BlockSpec((f_in, 2 * f_out), lambda i: (0, 0)),
            pl.BlockSpec((1, 2 * f_out), lambda i: (0, 0)),
        ],
        out_specs=pl.BlockSpec((tm, f_out), lambda i: (i, 0)),
        out_shape=jax.ShapeDtypeStruct((M, f_out), jnp.float32),
        compiler_params=pltpu.CompilerParams(dimension_semantics=("parallel",)),
    )(alpha, x2d, w_cat, b_cat.reshape(1, 2 * f_out))


# ----------------------------------------------------------------------------
# Plain-JAX glue (channel-last segmentation / overlap-add)
# ----------------------------------------------------------------------------
def segment_chlast(x_cl, chunk_size, hop_size):
    """(B, T, C) -> (B, S*K, C) overlapping chunks flattened along time."""
    B, T, C = x_cl.shape
    S = (T - chunk_size) // hop_size + 1
    idx = (jnp.arange(S)[:, None] * hop_size
           + jnp.arange(chunk_size)[None, :]).reshape(-1)
    return x_cl[:, idx, :], S


def overlap_add_chlast(x_cl, S, chunk_size, hop_size):
    """(B, S*K, C) -> (B, T, C) summing overlaps."""
    B, SK, C = x_cl.shape
    T = (S - 1) * hop_size + chunk_size
    idx = (jnp.arange(S)[:, None] * hop_size
           + jnp.arange(chunk_size)[None, :]).reshape(-1)
    out = jnp.zeros((B, T, C), x_cl.dtype)
    return out.at[:, idx, :].add(x_cl)


# ----------------------------------------------------------------------------
# Parameter init (deterministic, synthetic) — mirrors module __init__ shapes
# ----------------------------------------------------------------------------
def init_params(key, num_features):
    F = num_features
    F4 = 4 * F
    ks = jax.random.split(key, 16)

    def w(k, cin, cout, scale=0.2):
        return scale * jax.random.normal(k, (cin, cout), dtype=jnp.float32)

    def b(k, cout, scale=0.05):
        return scale * jax.random.normal(k, (cout,), dtype=jnp.float32)

    return {
        # norm2d: cLN(num_features)
        "norm2d_gamma": jnp.ones((F,), jnp.float32),
        "norm2d_beta": jnp.zeros((F,), jnp.float32),
        # PosteriorConverter(F, 4F, mask_nonlinear=sigmoid)
        "post_conv1_w": w(ks[0], F, F4),  "post_conv1_b": b(ks[1], F4),
        "post_conv2_w": w(ks[2], F4, F4), "post_conv2_b": b(ks[3], F4),
        "post_norm_gamma": jnp.ones((F4,), jnp.float32),
        "post_norm_beta": jnp.zeros((F4,), jnp.float32),
        "post_fc_w": w(ks[4], F4, F4),    "post_fc_b": b(ks[5], F4),
        # Denoiser.fc: Linear(4F, F)
        "fc_w": w(ks[6], F4, F),          "fc_b": b(ks[7], F),
        # PReLU (single shared parameter, PyTorch default init 0.25)
        "prelu_alpha": jnp.array([0.25], jnp.float32),
        # GTU1d(F, F, kernel_size=1): map conv + gate conv
        "gtu_map_w": w(ks[8], F, F),      "gtu_map_b": b(ks[9], F),
        "gtu_gate_w": w(ks[10], F, F),    "gtu_gate_b": b(ks[11], F),
    }


# ----------------------------------------------------------------------------
# Denoiser forward (source=None, diff=False path)
# ----------------------------------------------------------------------------
def denoiser_forward(params, x, src, *, chunk_size, hop_size):
    B, n_src, F, n_frames = x.shape
    Bp = B * n_src
    padding = (hop_size - (n_frames - chunk_size) % hop_size) % hop_size
    pad_l = padding // 2
    pad_r = padding - pad_l

    # GTU map/gate weights concatenated once -> single matmul in-kernel.
    gtu_w = jnp.concatenate([params["gtu_map_w"], params["gtu_gate_w"]], axis=1)
    gtu_b = jnp.concatenate([params["gtu_map_b"], params["gtu_gate_b"]], axis=0)

    # Posterior conv1 -> conv2 are two 1x1 convs with no nonlinearity between:
    # fold into a single linear map (exact).  Dropout p=0.1 is identity (eval).
    post_w12 = jnp.dot(params["post_conv1_w"], params["post_conv2_w"])
    post_b12 = (jnp.dot(params["post_conv1_b"].reshape(1, -1),
                        params["post_conv2_w"]).reshape(-1)
                + params["post_conv2_b"])

    def encode(t):
        """pad -> segment -> cLN -> posterior(conv, cLN, fc+sigmoid) -> fc.

        Channel-last throughout; returns (Bp, S*K, F) and S.
        """
        t = t.reshape(Bp, F, n_frames)
        t = jnp.pad(t, ((0, 0), (0, 0), (pad_l, pad_r)))      # F.pad on time
        t = jnp.transpose(t, (0, 2, 1))                        # single transpose in
        t, S = segment_chlast(t, chunk_size, hop_size)         # (Bp, S*K, F)
        T = t.shape[1]

        t = cln_chlast(t, params["norm2d_gamma"], params["norm2d_beta"])

        rows = t.reshape(Bp * T, F)
        # posterior conv1+conv2 (folded weights, single matmul)
        rows = linear_rows(rows, post_w12, post_b12)
        h = cln_chlast(rows.reshape(Bp, T, 4 * F),
                       params["post_norm_gamma"], params["post_norm_beta"])
        # posterior fc + sigmoid mask fused with Denoiser.fc (4F -> F)
        rows = fused_linear2(h.reshape(Bp * T, 4 * F),
                             params["post_fc_w"], params["post_fc_b"],
                             params["fc_w"], params["fc_b"],
                             mid_act="sigmoid")
        return rows.reshape(Bp, T, F), S

    src_seg, S = encode(src)
    x_seg, _ = encode(x)

    # TODO(synk): GALRDecoder (stacked GALR blocks: BLSTM + multi-head attention)
    # definition is not provided in the source file; identity passthrough.
    del src_seg
    x_post = x_seg

    def fold(t):
        t = overlap_add_chlast(t, S, chunk_size, hop_size)     # (Bp, T_pad, F)
        return t[:, pad_l:t.shape[1] - pad_r, :]               # F.pad negative

    x_post = fold(x_post)                                      # (Bp, n_frames, F)
    rows = x_post.reshape(Bp * n_frames, F)
    y = prelu_gtu_relu(rows, gtu_w, gtu_b, params["prelu_alpha"])
    output = jnp.transpose(y.reshape(B, n_src, n_frames, F), (0, 1, 3, 2))

    raw_post = jnp.transpose(fold(x_seg), (0, 2, 1))           # (Bp, F, n_frames)
    return output, raw_post


# ----------------------------------------------------------------------------
if __name__ == "__main__":
    # Small shapes consistent with the module's forward:
    # x, src : (batch, n_sources, num_features, n_frames)
    batch, n_sources, num_features, n_frames = 2, 2, 8, 18
    chunk_size, hop_size = 8, 4

    key = jax.random.PRNGKey(0)
    k_param, k_x, k_src = jax.random.split(key, 3)

    params = init_params(k_param, num_features)
    x = jax.random.normal(k_x, (batch, n_sources, num_features, n_frames),
                          dtype=jnp.float32)
    src = jax.random.normal(k_src, (batch, n_sources, num_features, n_frames),
                            dtype=jnp.float32)

    fwd = jax.jit(functools.partial(denoiser_forward,
                                    chunk_size=chunk_size, hop_size=hop_size))
    output, raw_post = fwd(params, x, src)
    jax.block_until_ready((output, raw_post))

    assert output.shape == (batch, n_sources, num_features, n_frames)
    assert raw_post.shape == (batch * n_sources, num_features, n_frames)
    assert jnp.all(jnp.isfinite(output)) and jnp.all(jnp.isfinite(raw_post))
    print("KERNEL_OK")
</pallas_src>

<mosaic_0001>
module attributes {stable_mosaic.version = 11 : i64} {
  func.func @_linear_kernel(%arg0: i32, %arg1: memref<128x8xf32, #tpu.memory_space<vmem>>, %arg2: memref<8x32xf32, #tpu.memory_space<vmem>>, %arg3: memref<1x32xf32, #tpu.memory_space<vmem>>, %arg4: memref<128x32xf32, #tpu.memory_space<vmem>>) attributes {dimension_semantics = [#tpu.dimension_semantics<parallel>], iteration_bounds = array<i64: 1>, scalar_prefetch = 0 : i64, scratch_operands = 0 : i64, tpu.core_type = #tpu.core_type<tc>, window_params = [{transform_indices = @transform_0, window_bounds = array<i64: 128, 8>}, {pipeline_mode = #tpu.pipeline_mode<synchronous>, transform_indices = @transform_1, window_bounds = array<i64: 8, 32>}, {pipeline_mode = #tpu.pipeline_mode<synchronous>, transform_indices = @transform_2, window_bounds = array<i64: 1, 32>}, {transform_indices = @transform_3, window_bounds = array<i64: 128, 32>}]} {
    %c0 = arith.constant 0 : index
    %c0_0 = arith.constant 0 : index
    %0 = vector.load %arg1[%c0, %c0_0] : memref<128x8xf32, #tpu.memory_space<vmem>>, vector<128x8xf32>
    %c0_1 = arith.constant 0 : index
    %c0_2 = arith.constant 0 : index
    %1 = vector.load %arg2[%c0_1, %c0_2] : memref<8x32xf32, #tpu.memory_space<vmem>>, vector<8x32xf32>
    %cst = arith.constant dense<0.000000e+00> : vector<128x32xf32>
    %2 = tpu.matmul %0, %1, %cst {dimension_numbers = #tpu.dot_dimension_numbers<[1], [0], [0], [1], [0, 0, 1, 1], [], []>} : vector<128x8xf32>, vector<8x32xf32>, vector<128x32xf32> -> vector<128x32xf32>
    %c0_3 = arith.constant 0 : index
    %c0_4 = arith.constant 0 : index
    %3 = vector.load %arg3[%c0_3, %c0_4] : memref<1x32xf32, #tpu.memory_space<vmem>>, vector<1x32xf32>
    %4 = vector.broadcast %3 : vector<1x32xf32> to vector<128x32xf32>
    %5 = arith.addf %2, %4 : vector<128x32xf32>
    %c0_5 = arith.constant 0 : index
    %c0_6 = arith.constant 0 : index
    %6 = vector.load %arg4[%c0_5, %c0_6] : memref<128x32xf32, #tpu.memory_space<vmem>>, vector<128x32xf32>
    tpu.vector_store %arg4[%c0_5, %c0_6], %5 {strides = array<i32>} : memref<128x32xf32, #tpu.memory_space<vmem>>, vector<128x32xf32>,
    return
  }
  func.func @transform_0(%arg0: i32) -> (i32, i32) {
    %c0_i32 = arith.constant 0 : i32
    %c0_i32_0 = arith.constant 0 : i32
    return %arg0, %c0_i32 : i32, i32
  }
  func.func @transform_1(%arg0: i32) -> (i32, i32) {
    %c0_i32 = arith.constant 0 : i32
    %c0_i32_0 = arith.constant 0 : i32
    %c0_i32_1 = arith.constant 0 : i32
    return %c0_i32, %c0_i32_0 : i32, i32
  }
  func.func @transform_2(%arg0: i32) -> (i32, i32) {
    %c0_i32 = arith.constant 0 : i32
    %c0_i32_0 = arith.constant 0 : i32
    %c0_i32_1 = arith.constant 0 : i32
    return %c0_i32, %c0_i32_0 : i32, i32
  }
  func.func @transform_3(%arg0: i32) -> (i32, i32) {
    %c0_i32 = arith.constant 0 : i32
    %c0_i32_0 = arith.constant 0 : i32
    return %arg0, %c0_i32 : i32, i32
  }
}

module attributes {stable_mosaic.version = 11 : i64} {
  func.func @_cln_kernel(%arg0: i32, %arg1: i32, %arg2: memref<1x32x32xf32, #tpu.memory_space<vmem>>, %arg3: memref<1x32xf32, #tpu.memory_space<vmem>>, %arg4: memref<1x32xf32, #tpu.memory_space<vmem>>, %arg5: memref<1x32x32xf32, #tpu.memory_space<vmem>>, %arg6: memref<1x2xf32, #tpu.memory_space<vmem>>) attributes {dimension_semantics = [#tpu.dimension_semantics<parallel>, #tpu.dimension_semantics<arbitrary>], iteration_bounds = array<i64: 4, 1>, scalar_prefetch = 0 : i64, scratch_operands = 1 : i64, tpu.core_type = #tpu.core_type<tc>, window_params = [{transform_indices = @transform_0, window_bounds = array<i64: 1, 32, 32>}, {pipeline_mode = #tpu.pipeline_mode<synchronous>, transform_indices = @transform_1, window_bounds = array<i64: 1, 32>}, {pipeline_mode = #tpu.pipeline_mode<synchronous>, transform_indices = @transform_2, window_bounds = array<i64: 1, 32>}, {transform_indices = @transform_3, window_bounds = array<i64: 1, 32, 32>}]} {
    %c0_i32 = arith.constant 0 : i32
    %0 = arith.cmpi eq, %arg1, %c0_i32 : i32
    %1 = arith.extui %0 : i1 to i32
    %c0_i32_0 = arith.constant 0 : i32
    %2 = arith.cmpi ne, %1, %c0_i32_0 : i32
    scf.if %2 {
      %cst_23 = arith.constant 0.000000e+00 : f32
      %66 = vector.broadcast %cst_23 : f32 to vector<1x2xf32>
      %c0_24 = arith.constant 0 : index
      %c0_25 = arith.constant 0 : index
      %67 = vector.load %arg6[%c0_24, %c0_25] : memref<1x2xf32, #tpu.memory_space<vmem>>, vector<1x2xf32>
      tpu.vector_store %arg6[%c0_24, %c0_25], %66 {strides = array<i32>} : memref<1x2xf32, #tpu.memory_space<vmem>>, vector<1x2xf32>,
    } else {
    }
    %c0 = arith.constant 0 : index
    %c0_1 = arith.constant 0 : index
    %c0_2 = arith.constant 0 : index
    %3 = vector.load %arg2[%c0, %c0_1, %c0_2] : memref<1x32x32xf32, #tpu.memory_space<vmem>>, vector<1x32x32xf32>
    %4 = vector.shape_cast %3 : vector<1x32x32xf32> to vector<32x32xf32>
    %5 = tpu.iota {dimensions = array<i32: 0>} : vector<32x1xi32>
    %c32_i32 = arith.constant 32 : i32
    %6 = arith.muli %arg1, %c32_i32 : i32
    %7 = vector.broadcast %6 : i32 to vector<32x1xi32>
    %8 = arith.addi %7, %5 : vector<32x1xi32>
    %c32_i32_3 = arith.constant 32 : i32
    %9 = vector.broadcast %c32_i32_3 : i32 to vector<32x1xi32>
    %10 = arith.cmpi slt, %8, %9 : vector<32x1xi32>
    %cst = arith.constant 0.000000e+00 : f32
    %11 = vector.shape_cast %10 : vector<32x1xi1> to vector<32x1xi1>
    %12 = vector.broadcast %11 : vector<32x1xi1> to vector<32x32xi1>
    %13 = vector.broadcast %cst : f32 to vector<32x32xf32>
    %14 = arith.select %12, %4, %13 : vector<32x32xi1>, vector<32x32xf32>
    %cst_4 = arith.constant dense<0.000000e+00> : vector<32xf32>
    %15 = vector.multi_reduction <add>, %14, %cst_4 [1] : vector<32x32xf32> to vector<32xf32>
    %16 = vector.shape_cast %15 : vector<32xf32> to vector<32x1xf32>
    %17 = arith.mulf %14, %14 : vector<32x32xf32>
    %cst_5 = arith.constant dense<0.000000e+00> : vector<32xf32>
    %18 = vector.multi_reduction <add>, %17, %cst_5 [1] : vector<32x32xf32> to vector<32xf32>
    %19 = vector.shape_cast %18 : vector<32xf32> to vector<32x1xf32>
    %20 = tpu.concatenate %16, %19 in 1 : vector<32x1xf32>, vector<32x1xf32> -> vector<32x2xf32>
    %21 = tpu.iota {dimensions = array<i32: 0>} : vector<32x32xi32>
    %22 = tpu.iota {dimensions = array<i32: 1>} : vector<32x32xi32>
    %23 = arith.cmpi sle, %22, %21 : vector<32x32xi32>
    %24 = arith.extui %23 : vector<32x32xi1> to vector<32x32xi32>
    %25 = arith.sitofp %24 : vector<32x32xi32> to vector<32x32xf32>
    %cst_6 = arith.constant dense<0.000000e+00> : vector<32x2xf32>
    %26 = tpu.matmul %25, %20, %cst_6 {dimension_numbers = #tpu.dot_dimension_numbers<[1], [0], [0], [1], [0, 0, 1, 1], [], []>} : vector<32x32xf32>, vector<32x2xf32>, vector<32x2xf32> -> vector<32x2xf32>
    %c0_7 = arith.constant 0 : index
    %c0_8 = arith.constant 0 : index
    %27 = vector.load %arg6[%c0_7, %c0_8] : memref<1x2xf32, #tpu.memory_space<vmem>>, vector<1x2xf32>
    %28 = vector.broadcast %27 : vector<1x2xf32> to vector<32x2xf32>
    %29 = arith.addf %26, %28 : vector<32x2xf32>
    %cst_9 = arith.constant dense<0.000000e+00> : vector<2xf32>
    %30 = vector.multi_reduction <add>, %20, %cst_9 [0] : vector<32x2xf32> to vector<2xf32>
    %31 = vector.shape_cast %30 : vector<2xf32> to vector<1x2xf32>
    %32 = arith.addf %27, %31 : vector<1x2xf32>
    %c0_10 = arith.constant 0 : index
    %c0_11 = arith.constant 0 : index
    %33 = vector.load %arg6[%c0_10, %c0_11] : memref<1x2xf32, #tpu.memory_space<vmem>>, vector<1x2xf32>
    tpu.vector_store %arg6[%c0_10, %c0_11], %32 {strides = array<i32>} : memref<1x2xf32, #tpu.memory_space<vmem>>, vector<1x2xf32>,
    %c32_i32_12 = arith.constant 32 : i32
    %34 = arith.muli %arg1, %c32_i32_12 : i32
    %35 = vector.broadcast %34 : i32 to vector<32x1xi32>
    %36 = arith.addi %5, %35 : vector<32x1xi32>
    %c1_i32 = arith.constant 1 : i32
    %37 = vector.broadcast %c1_i32 : i32 to vector<32x1xi32>
    %38 = arith.addi %36, %37 : vector<32x1xi32>
    %39 = arith.sitofp %38 : vector<32x1xi32> to vector<32x1xf32>
    %cst_13 = arith.constant 3.200000e+01 : f32
    %40 = vector.broadcast %cst_13 : f32 to vector<32x1xf32>
    %41 = arith.mulf %39, %40 : vector<32x1xf32>
    %42 = vector.extract_strided_slice %29 {offsets = [0, 0], sizes = [32, 1], strides = [1, 1]} : vector<32x2xf32> to vector<32x1xf32>
    %43 = vector.extract_strided_slice %29 {offsets = [0, 1], sizes = [32, 1], strides = [1, 1]} : vector<32x2xf32> to vector<32x1xf32>
    %44 = arith.divf %42, %41 : vector<32x1xf32>
    %45 = arith.divf %43, %41 : vector<32x1xf32>
    %46 = arith.mulf %44, %44 : vector<32x1xf32>
    %47 = arith.subf %45, %46 : vector<32x1xf32>
    %cst_14 = arith.constant 0.000000e+00 : f32
    %48 = vector.broadcast %cst_14 : f32 to vector<32x1xf32>
    %49 = arith.maximumf %47, %48 : vector<32x1xf32>
    %50 = vector.broadcast %44 : vector<32x1xf32> to vector<32x32xf32>
    %51 = arith.subf %14, %50 : vector<32x32xf32>
    %52 = math.sqrt %49 : vector<32x1xf32>
    %cst_15 = arith.constant 9.99999996E-13 : f32
    %53 = vector.broadcast %cst_15 : f32 to vector<32x1xf32>
    %54 = arith.addf %52, %53 : vector<32x1xf32>
    %55 = vector.broadcast %54 : vector<32x1xf32> to vector<32x32xf32>
    %56 = arith.divf %51, %55 : vector<32x32xf32>
    %c0_16 = arith.constant 0 : index
    %c0_17 = arith.constant 0 : index
    %57 = vector.load %arg3[%c0_16, %c0_17] : memref<1x32xf32, #tpu.memory_space<vmem>>, vector<1x32xf32>
    %58 = vector.broadcast %57 : vector<1x32xf32> to vector<32x32xf32>
    %59 = arith.mulf %56, %58 : vector<32x32xf32>
    %c0_18 = arith.constant 0 : index
    %c0_19 = arith.constant 0 : index
    %60 = vector.load %arg4[%c0_18, %c0_19] : memref<1x32xf32, #tpu.memory_space<vmem>>, vector<1x32xf32>
    %61 = vector.broadcast %60 : vector<1x32xf32> to vector<32x32xf32>
    %62 = arith.addf %59, %61 : vector<32x32xf32>
    %c0_20 = arith.constant 0 : index
    %c0_21 = arith.constant 0 : index
    %c0_22 = arith.constant 0 : index
    %63 = vector.load %arg5[%c0_20, %c0_21, %c0_22] : memref<1x32x32xf32, #tpu.memory_space<vmem>>, vector<1x32x32xf32>
    %64 = vector.shape_cast %63 : vector<1x32x32xf32> to vector<32x32xf32>
    %65 = vector.shape_cast %62 : vector<32x32xf32> to vector<1x32x32xf32>
    tpu.vector_store %arg5[%c0_20, %c0_21, %c0_22], %65 {strides = array<i32>} : memref<1x32x32xf32, #tpu.memory_space<vmem>>, vector<1x32x32xf32>,
    return
  }
  func.func @transform_0(%arg0: i32, %arg1: i32) -> (i32, i32, i32) {
    %c0_i32 = arith.constant 0 : i32
    %c0_i32_0 = arith.constant 0 : i32
    return %arg0, %arg1, %c0_i32 : i32, i32, i32
  }
  func.func @transform_1(%arg0: i32, %arg1: i32) -> (i32, i32) {
    %c0_i32 = arith.constant 0 : i32
    %c0_i32_0 = arith.constant 0 : i32
    %c0_i32_1 = arith.constant 0 : i32
    return %c0_i32, %c0_i32_0 : i32, i32
  }
  func.func @transform_2(%arg0: i32, %arg1: i32) -> (i32, i32) {
    %c0_i32 = arith.constant 0 : i32
    %c0_i32_0 = arith.constant 0 : i32
    %c0_i32_1 = arith.constant 0 : i32
    return %c0_i32, %c0_i32_0 : i32, i32
  }
  func.func @transform_3(%arg0: i32, %arg1: i32) -> (i32, i32, i32) {
    %c0_i32 = arith.constant 0 : i32
    %c0_i32_0 = arith.constant 0 : i32
    return %arg0, %arg1, %c0_i32 : i32, i32, i32
  }
}

module attributes {stable_mosaic.version = 11 : i64} {
  func.func @_cln_kernel(%arg0: i32, %arg1: i32, %arg2: memref<1x32x8xf32, #tpu.memory_space<vmem>>, %arg3: memref<1x8xf32, #tpu.memory_space<vmem>>, %arg4: memref<1x8xf32, #tpu.memory_space<vmem>>, %arg5: memref<1x32x8xf32, #tpu.memory_space<vmem>>, %arg6: memref<1x2xf32, #tpu.memory_space<vmem>>) attributes {dimension_semantics = [#tpu.dimension_semantics<parallel>, #tpu.dimension_semantics<arbitrary>], iteration_bounds = array<i64: 4, 1>, scalar_prefetch = 0 : i64, scratch_operands = 1 : i64, tpu.core_type = #tpu.core_type<tc>, window_params = [{transform_indices = @transform_0, window_bounds = array<i64: 1, 32, 8>}, {pipeline_mode = #tpu.pipeline_mode<synchronous>, transform_indices = @transform_1, window_bounds = array<i64: 1, 8>}, {pipeline_mode = #tpu.pipeline_mode<synchronous>, transform_indices = @transform_2, window_bounds = array<i64: 1, 8>}, {transform_indices = @transform_3, window_bounds = array<i64: 1, 32, 8>}]} {
    %c0_i32 = arith.constant 0 : i32
    %0 = arith.cmpi eq, %arg1, %c0_i32 : i32
    %1 = arith.extui %0 : i1 to i32
    %c0_i32_0 = arith.constant 0 : i32
    %2 = arith.cmpi ne, %1, %c0_i32_0 : i32
    scf.if %2 {
      %cst_23 = arith.constant 0.000000e+00 : f32
      %66 = vector.broadcast %cst_23 : f32 to vector<1x2xf32>
      %c0_24 = arith.constant 0 : index
      %c0_25 = arith.constant 0 : index
      %67 = vector.load %arg6[%c0_24, %c0_25] : memref<1x2xf32, #tpu.memory_space<vmem>>, vector<1x2xf32>
      tpu.vector_store %arg6[%c0_24, %c0_25], %66 {strides = array<i32>} : memref<1x2xf32, #tpu.memory_space<vmem>>, vector<1x2xf32>,
    } else {
    }
    %c0 = arith.constant 0 : index
    %c0_1 = arith.constant 0 : index
    %c0_2 = arith.constant 0 : index
    %3 = vector.load %arg2[%c0, %c0_1, %c0_2] : memref<1x32x8xf32, #tpu.memory_space<vmem>>, vector<1x32x8xf32>
    %4 = vector.shape_cast %3 : vector<1x32x8xf32> to vector<32x8xf32>
    %5 = tpu.iota {dimensions = array<i32: 0>} : vector<32x1xi32>
    %c32_i32 = arith.constant 32 : i32
    %6 = arith.muli %arg1, %c32_i32 : i32
    %7 = vector.broadcast %6 : i32 to vector<32x1xi32>
    %8 = arith.addi %7, %5 : vector<32x1xi32>
    %c32_i32_3 = arith.constant 32 : i32
    %9 = vector.broadcast %c32_i32_3 : i32 to vector<32x1xi32>
    %10 = arith.cmpi slt, %8, %9 : vector<32x1xi32>
    %cst = arith.constant 0.000000e+00 : f32
    %11 = vector.shape_cast %10 : vector<32x1xi1> to vector<32x1xi1>
    %12 = vector.broadcast %11 : vector<32x1xi1> to vector<32x8xi1>
    %13 = vector.broadcast %cst : f32 to vector<32x8xf32>
    %14 = arith.select %12, %4, %13 : vector<32x8xi1>, vector<32x8xf32>
    %cst_4 = arith.constant dense<0.000000e+00> : vector<32xf32>
    %15 = vector.multi_reduction <add>, %14, %cst_4 [1] : vector<32x8xf32> to vector<32xf32>
    %16 = vector.shape_cast %15 : vector<32xf32> to vector<32x1xf32>
    %17 = arith.mulf %14, %14 : vector<32x8xf32>
    %cst_5 = arith.constant dense<0.000000e+00> : vector<32xf32>
    %18 = vector.multi_reduction <add>, %17, %cst_5 [1] : vector<32x8xf32> to vector<32xf32>
    %19 = vector.shape_cast %18 : vector<32xf32> to vector<32x1xf32>
    %20 = tpu.concatenate %16, %19 in 1 : vector<32x1xf32>, vector<32x1xf32> -> vector<32x2xf32>
    %21 = tpu.iota {dimensions = array<i32: 0>} : vector<32x32xi32>
    %22 = tpu.iota {dimensions = array<i32: 1>} : vector<32x32xi32>
    %23 = arith.cmpi sle, %22, %21 : vector<32x32xi32>
    %24 = arith.extui %23 : vector<32x32xi1> to vector<32x32xi32>
    %25 = arith.sitofp %24 : vector<32x32xi32> to vector<32x32xf32>
    %cst_6 = arith.constant dense<0.000000e+00> : vector<32x2xf32>
    %26 = tpu.matmul %25, %20, %cst_6 {dimension_numbers = #tpu.dot_dimension_numbers<[1], [0], [0], [1], [0, 0, 1, 1], [], []>} : vector<32x32xf32>, vector<32x2xf32>, vector<32x2xf32> -> vector<32x2xf32>
    %c0_7 = arith.constant 0 : index
    %c0_8 = arith.constant 0 : index
    %27 = vector.load %arg6[%c0_7, %c0_8] : memref<1x2xf32, #tpu.memory_space<vmem>>, vector<1x2xf32>
    %28 = vector.broadcast %27 : vector<1x2xf32> to vector<32x2xf32>
    %29 = arith.addf %26, %28 : vector<32x2xf32>
    %cst_9 = arith.constant dense<0.000000e+00> : vector<2xf32>
    %30 = vector.multi_reduction <add>, %20, %cst_9 [0] : vector<32x2xf32> to vector<2xf32>
    %31 = vector.shape_cast %30 : vector<2xf32> to vector<1x2xf32>
    %32 = arith.addf %27, %31 : vector<1x2xf32>
    %c0_10 = arith.constant 0 : index
    %c0_11 = arith.constant 0 : index
    %33 = vector.load %arg6[%c0_10, %c0_11] : memref<1x2xf32, #tpu.memory_space<vmem>>, vector<1x2xf32>
    tpu.vector_store %arg6[%c0_10, %c0_11], %32 {strides = array<i32>} : memref<1x2xf32, #tpu.memory_space<vmem>>, vector<1x2xf32>,
    %c32_i32_12 = arith.constant 32 : i32
    %34 = arith.muli %arg1, %c32_i32_12 : i32
    %35 = vector.broadcast %34 : i32 to vector<32x1xi32>
    %36 = arith.addi %5, %35 : vector<32x1xi32>
    %c1_i32 = arith.constant 1 : i32
    %37 = vector.broadcast %c1_i32 : i32 to vector<32x1xi32>
    %38 = arith.addi %36, %37 : vector<32x1xi32>
    %39 = arith.sitofp %38 : vector<32x1xi32> to vector<32x1xf32>
    %cst_13 = arith.constant 8.000000e+00 : f32
    %40 = vector.broadcast %cst_13 : f32 to vector<32x1xf32>
    %41 = arith.mulf %39, %40 : vector<32x1xf32>
    %42 = vector.extract_strided_slice %29 {offsets = [0, 0], sizes = [32, 1], strides = [1, 1]} : vector<32x2xf32> to vector<32x1xf32>
    %43 = vector.extract_strided_slice %29 {offsets = [0, 1], sizes = [32, 1], strides = [1, 1]} : vector<32x2xf32> to vector<32x1xf32>
    %44 = arith.divf %42, %41 : vector<32x1xf32>
    %45 = arith.divf %43, %41 : vector<32x1xf32>
    %46 = arith.mulf %44, %44 : vector<32x1xf32>
    %47 = arith.subf %45, %46 : vector<32x1xf32>
    %cst_14 = arith.constant 0.000000e+00 : f32
    %48 = vector.broadcast %cst_14 : f32 to vector<32x1xf32>
    %49 = arith.maximumf %47, %48 : vector<32x1xf32>
    %50 = vector.broadcast %44 : vector<32x1xf32> to vector<32x8xf32>
    %51 = arith.subf %14, %50 : vector<32x8xf32>
    %52 = math.sqrt %49 : vector<32x1xf32>
    %cst_15 = arith.constant 9.99999996E-13 : f32
    %53 = vector.broadcast %cst_15 : f32 to vector<32x1xf32>
    %54 = arith.addf %52, %53 : vector<32x1xf32>
    %55 = vector.broadcast %54 : vector<32x1xf32> to vector<32x8xf32>
    %56 = arith.divf %51, %55 : vector<32x8xf32>
    %c0_16 = arith.constant 0 : index
    %c0_17 = arith.constant 0 : index
    %57 = vector.load %arg3[%c0_16, %c0_17] : memref<1x8xf32, #tpu.memory_space<vmem>>, vector<1x8xf32>
    %58 = vector.broadcast %57 : vector<1x8xf32> to vector<32x8xf32>
    %59 = arith.mulf %56, %58 : vector<32x8xf32>
    %c0_18 = arith.constant 0 : index
    %c0_19 = arith.constant 0 : index
    %60 = vector.load %arg4[%c0_18, %c0_19] : memref<1x8xf32, #tpu.memory_space<vmem>>, vector<1x8xf32>
    %61 = vector.broadcast %60 : vector<1x8xf32> to vector<32x8xf32>
    %62 = arith.addf %59, %61 : vector<32x8xf32>
    %c0_20 = arith.constant 0 : index
    %c0_21 = arith.constant 0 : index
    %c0_22 = arith.constant 0 : index
    %63 = vector.load %arg5[%c0_20, %c0_21, %c0_22] : memref<1x32x8xf32, #tpu.memory_space<vmem>>, vector<1x32x8xf32>
    %64 = vector.shape_cast %63 : vector<1x32x8xf32> to vector<32x8xf32>
    %65 = vector.shape_cast %62 : vector<32x8xf32> to vector<1x32x8xf32>
    tpu.vector_store %arg5[%c0_20, %c0_21, %c0_22], %65 {strides = array<i32>} : memref<1x32x8xf32, #tpu.memory_space<vmem>>, vector<1x32x8xf32>,
    return
  }
  func.func @transform_0(%arg0: i32, %arg1: i32) -> (i32, i32, i32) {
    %c0_i32 = arith.constant 0 : i32
    %c0_i32_0 = arith.constant 0 : i32
    return %arg0, %arg1, %c0_i32 : i32, i32, i32
  }
  func.func @transform_1(%arg0: i32, %arg1: i32) -> (i32, i32) {
    %c0_i32 = arith.constant 0 : i32
    %c0_i32_0 = arith.constant 0 : i32
    %c0_i32_1 = arith.constant 0 : i32
    return %c0_i32, %c0_i32_0 : i32, i32
  }
  func.func @transform_2(%arg0: i32, %arg1: i32) -> (i32, i32) {
    %c0_i32 = arith.constant 0 : i32
    %c0_i32_0 = arith.constant 0 : i32
    %c0_i32_1 = arith.constant 0 : i32
    return %c0_i32, %c0_i32_0 : i32, i32
  }
  func.func @transform_3(%arg0: i32, %arg1: i32) -> (i32, i32, i32) {
    %c0_i32 = arith.constant 0 : i32
    %c0_i32_0 = arith.constant 0 : i32
    return %arg0, %arg1, %c0_i32 : i32, i32, i32
  }
}

module attributes {stable_mosaic.version = 11 : i64} {
  func.func @_linear2_kernel(%arg0: i32, %arg1: memref<128x32xf32, #tpu.memory_space<vmem>>, %arg2: memref<32x32xf32, #tpu.memory_space<vmem>>, %arg3: memref<1x32xf32, #tpu.memory_space<vmem>>, %arg4: memref<32x8xf32, #tpu.memory_space<vmem>>, %arg5: memref<1x8xf32, #tpu.memory_space<vmem>>, %arg6: memref<128x8xf32, #tpu.memory_space<vmem>>) attributes {dimension_semantics = [#tpu.dimension_semantics<parallel>], iteration_bounds = array<i64: 1>, scalar_prefetch = 0 : i64, scratch_operands = 0 : i64, tpu.core_type = #tpu.core_type<tc>, window_params = [{transform_indices = @transform_0, window_bounds = array<i64: 128, 32>}, {pipeline_mode = #tpu.pipeline_mode<synchronous>, transform_indices = @transform_1, window_bounds = array<i64: 32, 32>}, {pipeline_mode = #tpu.pipeline_mode<synchronous>, transform_indices = @transform_2, window_bounds = array<i64: 1, 32>}, {pipeline_mode = #tpu.pipeline_mode<synchronous>, transform_indices = @transform_3, window_bounds = array<i64: 32, 8>}, {pipeline_mode = #tpu.pipeline_mode<synchronous>, transform_indices = @transform_4, window_bounds = array<i64: 1, 8>}, {transform_indices = @transform_5, window_bounds = array<i64: 128, 8>}]} {
    %c0 = arith.constant 0 : index
    %c0_0 = arith.constant 0 : index
    %0 = vector.load %arg1[%c0, %c0_0] : memref<128x32xf32, #tpu.memory_space<vmem>>, vector<128x32xf32>
    %c0_1 = arith.constant 0 : index
    %c0_2 = arith.constant 0 : index
    %1 = vector.load %arg2[%c0_1, %c0_2] : memref<32x32xf32, #tpu.memory_space<vmem>>, vector<32x32xf32>
    %cst = arith.constant dense<0.000000e+00> : vector<128x32xf32>
    %2 = tpu.matmul %0, %1, %cst {dimension_numbers = #tpu.dot_dimension_numbers<[1], [0], [0], [1], [0, 0, 1, 1], [], []>} : vector<128x32xf32>, vector<32x32xf32>, vector<128x32xf32> -> vector<128x32xf32>
    %c0_3 = arith.constant 0 : index
    %c0_4 = arith.constant 0 : index
    %3 = vector.load %arg3[%c0_3, %c0_4] : memref<1x32xf32, #tpu.memory_space<vmem>>, vector<1x32xf32>
    %4 = vector.broadcast %3 : vector<1x32xf32> to vector<128x32xf32>
    %5 = arith.addf %2, %4 : vector<128x32xf32>
    %6 = arith.negf %5 : vector<128x32xf32>
    %7 = math.exp %6 : vector<128x32xf32>
    %cst_5 = arith.constant 1.000000e+00 : f32
    %8 = vector.broadcast %cst_5 : f32 to vector<128x32xf32>
    %9 = arith.addf %8, %7 : vector<128x32xf32>
    %10 = arith.divf %8, %9 : vector<128x32xf32>
    %c0_6 = arith.constant 0 : index
    %c0_7 = arith.constant 0 : index
    %11 = vector.load %arg4[%c0_6, %c0_7] : memref<32x8xf32, #tpu.memory_space<vmem>>, vector<32x8xf32>
    %cst_8 = arith.constant dense<0.000000e+00> : vector<128x8xf32>
    %12 = tpu.matmul %10, %11, %cst_8 {dimension_numbers = #tpu.dot_dimension_numbers<[1], [0], [0], [1], [0, 0, 1, 1], [], []>} : vector<128x32xf32>, vector<32x8xf32>, vector<128x8xf32> -> vector<128x8xf32>
    %c0_9 = arith.constant 0 : index
    %c0_10 = arith.constant 0 : index
    %13 = vector.load %arg5[%c0_9, %c0_10] : memref<1x8xf32, #tpu.memory_space<vmem>>, vector<1x8xf32>
    %14 = vector.broadcast %13 : vector<1x8xf32> to vector<128x8xf32>
    %15 = arith.addf %12, %14 : vector<128x8xf32>
    %c0_11 = arith.constant 0 : index
    %c0_12 = arith.constant 0 : index
    %16 = vector.load %arg6[%c0_11, %c0_12] : memref<128x8xf32, #tpu.memory_space<vmem>>, vector<128x8xf32>
    tpu.vector_store %arg6[%c0_11, %c0_12], %15 {strides = array<i32>} : memref<128x8xf32, #tpu.memory_space<vmem>>, vector<128x8xf32>,
    return
  }
  func.func @transform_0(%arg0: i32) -> (i32, i32) {
    %c0_i32 = arith.constant 0 : i32
    %c0_i32_0 = arith.constant 0 : i32
    return %arg0, %c0_i32 : i32, i32
  }
  func.func @transform_1(%arg0: i32) -> (i32, i32) {
    %c0_i32 = arith.constant 0 : i32
    %c0_i32_0 = arith.constant 0 : i32
    %c0_i32_1 = arith.constant 0 : i32
    return %c0_i32, %c0_i32_0 : i32, i32
  }
  func.func @transform_2(%arg0: i32) -> (i32, i32) {
    %c0_i32 = arith.constant 0 : i32
    %c0_i32_0 = arith.constant 0 : i32
    %c0_i32_1 = arith.constant 0 : i32
    return %c0_i32, %c0_i32_0 : i32, i32
  }
  func.func @transform_3(%arg0: i32) -> (i32, i32) {
    %c0_i32 = arith.constant 0 : i32
    %c0_i32_0 = arith.constant 0 : i32
    %c0_i32_1 = arith.constant 0 : i32
    return %c0_i32, %c0_i32_0 : i32, i32
  }
  func.func @transform_4(%arg0: i32) -> (i32, i32) {
    %c0_i32 = arith.constant 0 : i32
    %c0_i32_0 = arith.constant 0 : i32
    %c0_i32_1 = arith.constant 0 : i32
    return %c0_i32, %c0_i32_0 : i32, i32
  }
  func.func @transform_5(%arg0: i32) -> (i32, i32) {
    %c0_i32 = arith.constant 0 : i32
    %c0_i32_0 = arith.constant 0 : i32
    return %arg0, %c0_i32 : i32, i32
  }
}

module attributes {stable_mosaic.version = 11 : i64} {
  func.func @_gtu_kernel(%arg0: i32, %arg1: memref<1xf32, #tpu.memory_space<smem>>, %arg2: memref<72x8xf32, #tpu.memory_space<vmem>>, %arg3: memref<8x16xf32, #tpu.memory_space<vmem>>, %arg4: memref<1x16xf32, #tpu.memory_space<vmem>>, %arg5: memref<72x8xf32, #tpu.memory_space<vmem>>) attributes {dimension_semantics = [#tpu.dimension_semantics<parallel>], iteration_bounds = array<i64: 1>, scalar_prefetch = 0 : i64, scratch_operands = 0 : i64, tpu.core_type = #tpu.core_type<tc>, window_params = [{transform_indices = @transform_0, window_bounds = array<i64: 1>}, {transform_indices = @transform_1, window_bounds = array<i64: 72, 8>}, {pipeline_mode = #tpu.pipeline_mode<synchronous>, transform_indices = @transform_2, window_bounds = array<i64: 8, 16>}, {pipeline_mode = #tpu.pipeline_mode<synchronous>, transform_indices = @transform_3, window_bounds = array<i64: 1, 16>}, {transform_indices = @transform_4, window_bounds = array<i64: 72, 8>}]} {
    %c0 = arith.constant 0 : index
    %c0_0 = arith.constant 0 : index
    %0 = vector.load %arg2[%c0, %c0_0] : memref<72x8xf32, #tpu.memory_space<vmem>>, vector<72x8xf32>
    %c0_1 = arith.constant 0 : index
    %1 = memref.load %arg1[%c0_1] : memref<1xf32, #tpu.memory_space<smem>>
    %cst = arith.constant 0.000000e+00 : f32
    %2 = vector.broadcast %cst : f32 to vector<72x8xf32>
    %3 = arith.cmpf oge, %0, %2 : vector<72x8xf32>
    %4 = vector.broadcast %1 : f32 to vector<72x8xf32>
    %5 = arith.mulf %4, %0 : vector<72x8xf32>
    %6 = arith.select %3, %0, %5 : vector<72x8xi1>, vector<72x8xf32>
    %c0_2 = arith.constant 0 : index
    %c0_3 = arith.constant 0 : index
    %7 = vector.load %arg3[%c0_2, %c0_3] : memref<8x16xf32, #tpu.memory_space<vmem>>, vector<8x16xf32>
    %cst_4 = arith.constant dense<0.000000e+00> : vector<72x16xf32>
    %8 = tpu.matmul %6, %7, %cst_4 {dimension_numbers = #tpu.dot_dimension_numbers<[1], [0], [0], [1], [0, 0, 1, 1], [], []>} : vector<72x8xf32>, vector<8x16xf32>, vector<72x16xf32> -> vector<72x16xf32>
    %c0_5 = arith.constant 0 : index
    %c0_6 = arith.constant 0 : index
    %9 = vector.load %arg4[%c0_5, %c0_6] : memref<1x16xf32, #tpu.memory_space<vmem>>, vector<1x16xf32>
    %10 = vector.broadcast %9 : vector<1x16xf32> to vector<72x16xf32>
    %11 = arith.addf %8, %10 : vector<72x16xf32>
    %12 = vector.extract_strided_slice %11 {offsets = [0, 0], sizes = [72, 8], strides = [1, 1]} : vector<72x16xf32> to vector<72x8xf32>
    %13 = vector.extract_strided_slice %11 {offsets = [0, 8], sizes = [72, 8], strides = [1, 1]} : vector<72x16xf32> to vector<72x8xf32>
    %14 = math.tanh %12 : vector<72x8xf32>
    %15 = arith.negf %13 : vector<72x8xf32>
    %16 = math.exp %15 : vector<72x8xf32>
    %cst_7 = arith.constant 1.000000e+00 : f32
    %17 = vector.broadcast %cst_7 : f32 to vector<72x8xf32>
    %18 = arith.addf %17, %16 : vector<72x8xf32>
    %19 = arith.divf %17, %18 : vector<72x8xf32>
    %20 = arith.mulf %14, %19 : vector<72x8xf32>
    %cst_8 = arith.constant 0.000000e+00 : f32
    %21 = vector.broadcast %cst_8 : f32 to vector<72x8xf32>
    %22 = arith.maximumf %20, %21 : vector<72x8xf32>
    %c0_9 = arith.constant 0 : index
    %c0_10 = arith.constant 0 : index
    %23 = vector.load %arg5[%c0_9, %c0_10] : memref<72x8xf32, #tpu.memory_space<vmem>>, vector<72x8xf32>
    tpu.vector_store %arg5[%c0_9, %c0_10], %22 {strides = array<i32>} : memref<72x8xf32, #tpu.memory_space<vmem>>, vector<72x8xf32>,
    return
  }
  func.func @transform_0(%arg0: i32) -> i32 {
    %c0_i32 = arith.constant 0 : i32
    %c0_i32_0 = arith.constant 0 : i32
    return %c0_i32 : i32
  }
  func.func @transform_1(%arg0: i32) -> (i32, i32) {
    %c0_i32 = arith.constant 0 : i32
    %c0_i32_0 = arith.constant 0 : i32
    return %arg0, %c0_i32 : i32, i32
  }
  func.func @transform_2(%arg0: i32) -> (i32, i32) {
    %c0_i32 = arith.constant 0 : i32
    %c0_i32_0 = arith.constant 0 : i32
    %c0_i32_1 = arith.constant 0 : i32
    return %c0_i32, %c0_i32_0 : i32, i32
  }
  func.func @transform_3(%arg0: i32) -> (i32, i32) {
    %c0_i32 = arith.constant 0 : i32
    %c0_i32_0 = arith.constant 0 : i32
    %c0_i32_1 = arith.constant 0 : i32
    return %c0_i32, %c0_i32_0 : i32, i32
  }
  func.func @transform_4(%arg0: i32) -> (i32, i32) {
    %c0_i32 = arith.constant 0 : i32
    %c0_i32_0 = arith.constant 0 : i32
    return %arg0, %c0_i32 : i32, i32
  }
}

</mosaic_0001>

<llo_original>
// kernel: denoiser_forward.5
$region0: #{denoiser_forward.5}
  #allocation0 [shape = 'u32[]', space=smem, size = 0x4, offset = 0x4, fixed_abs, tag = 'smem constant byte address 0x4 - core index']
  #allocation1 [shape = 'u32[72,128]{1,0:T(1,128)}', space=vmem, size = 0x9000, scoped, tag = 'internal scratch']
  #allocation2 [shape = 'f32[1,2]{1,0:T(1,128)}', space=vmem, size = 0x200, scoped, tag = 'scratch operand']
  %s0 = inlined_call_operand.vmem [shape: f32[4,32,8], index: 0, kind: input, shape index: {}]
  %s1 = inlined_call_operand.vmem [shape: f32[1,8], index: 1, kind: input, shape index: {}]
  %s2 = inlined_call_operand.vmem [shape: f32[1,8], index: 2, kind: input, shape index: {}]
  %s3 = inlined_call_operand.vmem [shape: f32[4,32,8], index: 3, kind: output, shape index: {}]
  %s4 = sld [smem:[#allocation0]]
  $region49: #{denoiser_forward.5} parent=0
    _
  %s6 = ssub.s32 1, %s4
  %s7 = scalar_select 0, %s6, %s4
  loop: start=0, step=1, limit=6
  $region2: #{denoiser_forward.5} parent=0 // loop_pre_header
    _
  $region3: #{denoiser_forward.5} parent=0 // loop_header
    %s9 = sphi 0, %s13
    %p10 = scmp.ge.s32.totalorder %s9, 6
    %s16 = sphi 0, %s28
    %s17 = sphi 0, %s24
    %s18 = sphi 0, %s16
    %s19 = sphi 0, %s17
    %s20 = sphi 0, %s18
    %s21 = sphi 0, %s19
    %s33 = sphi 0, %s35
    %s36 = sphi 0, %s33
    %s37 = sphi 0, %s36
    %s53 = sphi 0, %s37
    %s57 = sphi 0, %s57
    %s59 = sphi 0, %s57
    %s60 = sphi 0, %s59
    %s74 = sphi 0, %s60
    %s78 = sphi 0, %s78
    %s80 = sphi 0, %s78
    %s81 = sphi 0, %s80
    %s95 = sphi 0, %s81
    %s103 = sphi 0, %s105
    %s106 = sphi 0, %s103
    %s107 = sphi 0, %s106
    %s123 = sphi 0, %s107
  $region4: #{denoiser_forward.5} parent=0 // loop_header_branch
    %12 = sbr.rel (%p10) target = $region8
  $region5: #{denoiser_forward.5} parent=0 // loop_body
    %s14 = ssub.s32 %s9, 1
    %s15 = ssub.s32 %s9, 2
    %s22 = sadd.s32 1, %s17
    %p23 = scmp.ge.s32.totalorder %s22, 1
    %s24 = scalar_select %p23, 0, %s22
    %s25 = sadd.s32 1, %s16
    %s26 = scalar_select %p23, %s25, %s16
    %p27 = scmp.ge.s32.totalorder %s26, 4
    %s28 = scalar_select %p27, 0, %s26
    %s29 = ssub.s32 %s16, %s28
    %s30 = ssub.s32 %s17, %s24
    %s31 = sor.u32 %s29, %s30
    %p32 = scmp.eq.s32.totalorder %s31, 0
    %s34 = sadd.s32 %s33, 1
    %s35 = scalar_select %p32, %s33, %s34
    %p38 = pneg %p32
    %p39 = scmp.eq.s32.totalorder %s9, 3
    %p40 = por %p38, %p39
    %p41 = scmp.ne.s32.totalorder %s33, %s36
    %p42 = scmp.eq.s32.totalorder %s9, 0
    %p43 = por %p41, %p42
    %p44 = scmp.ne.s32.totalorder %s33, %s36
    %p45 = scmp.eq.s32.totalorder %s14, 3
    %p46 = por %p44, %p45
    %p47 = scmp.ne.s32.totalorder %s36, %s37
    %p48 = scmp.eq.s32.totalorder %s14, 0
    %p49 = por %p47, %p48
    %p50 = scmp.ne.s32.totalorder %s36, %s37
    %p51 = scmp.eq.s32.totalorder %s15, 3
    %p52 = por %p50, %p51
    %p54 = scmp.ne.s32.totalorder %s37, %s53
    %p55 = scmp.eq.s32.totalorder %s15, 0
    %p56 = por %p54, %p55
    %s58 = sadd.s32 %s57, 1
    %p61 = scmp.eq.s32.totalorder %s9, 3
    %p62 = scmp.ne.s32.totalorder %s57, %s59
    %p63 = scmp.eq.s32.totalorder %s9, 0
    %p64 = por %p62, %p63
    %p65 = scmp.ne.s32.totalorder %s57, %s59
    %p66 = scmp.eq.s32.totalorder %s14, 3
    %p67 = por %p65, %p66
    %p68 = scmp.ne.s32.totalorder %s59, %s60
    %p69 = scmp.eq.s32.totalorder %s14, 0
    %p70 = por %p68, %p69
    %p71 = scmp.ne.s32.totalorder %s59, %s60
    %p72 = scmp.eq.s32.totalorder %s15, 3
    %p73 = por %p71, %p72
    %p75 = scmp.ne.s32.totalorder %s60, %s74
    %p76 = scmp.eq.s32.totalorder %s15, 0
    %p77 = por %p75, %p76
    %s79 = sadd.s32 %s78, 1
    %p82 = scmp.eq.s32.totalorder %s9, 3
    %p83 = scmp.ne.s32.totalorder %s78, %s80
    %p84 = scmp.eq.s32.totalorder %s9, 0
    %p85 = por %p83, %p84
    %p86 = scmp.ne.s32.totalorder %s78, %s80
    %p87 = scmp.eq.s32.totalorder %s14, 3
    %p88 = por %p86, %p87
    %p89 = scmp.ne.s32.totalorder %s80, %s81
    %p90 = scmp.eq.s32.totalorder %s14, 0
    %p91 = por %p89, %p90
    %p92 = scmp.ne.s32.totalorder %s80, %s81
    %p93 = scmp.eq.s32.totalorder %s15, 3
    %p94 = por %p92, %p93
    %p96 = scmp.ne.s32.totalorder %s81, %s95
    %p97 = scmp.eq.s32.totalorder %s15, 0
    %p98 = por %p96, %p97
    %s99 = ssub.s32 %s16, %s28
    %s100 = ssub.s32 %s17, %s24
    %s101 = sor.u32 %s99, %s100
    %p102 = scmp.eq.s32.totalorder %s101, 0
    %s104 = sadd.s32 %s103, 1
    %s105 = scalar_select %p102, %s103, %s104
    %p108 = pneg %p102
    %p109 = scmp.eq.s32.totalorder %s9, 3
    %p110 = por %p108, %p109
    %p111 = scmp.ne.s32.totalorder %s103, %s106
    %p112 = scmp.eq.s32.totalorder %s9, 0
    %p113 = por %p111, %p112
    %p114 = scmp.ne.s32.totalorder %s103, %s106
    %p115 = scmp.eq.s32.totalorder %s14, 3
    %p116 = por %p114, %p115
    %p117 = scmp.ne.s32.totalorder %s106, %s107
    %p118 = scmp.eq.s32.totalorder %s14, 0
    %p119 = por %p117, %p118
    %p120 = scmp.ne.s32.totalorder %s106, %s107
    %p121 = scmp.eq.s32.totalorder %s15, 3
    %p122 = por %p120, %p121
    %p124 = scmp.ne.s32.totalorder %s107, %s123
    %p125 = scmp.eq.s32.totalorder %s15, 0
    %p126 = por %p124, %p125
    %p127 = scmp.le.s32.totalorder 1, %s9
    %p128 = scmp.lt.s32.totalorder %s9, 5
    %p129 = pnand %p127, %p128
    %p130 = pneg %p129
    // Predicated region
    $region9: #{denoiser_forward.5} parent=5 // pred_check
      _
    $region10: #{denoiser_forward.5} parent=5 // pred_check_branch
      %132 = sbr.rel (%p129) target = $region12
    $region11: #{denoiser_forward.5} parent=5 // pred_region
      %s133 = ssub.s32 %s9, 1
      // Predicated region
      $region13: #{denoiser_forward.5} parent=11 // pred_check
        %p134 = pneg %p70
      $region14: #{denoiser_forward.5} parent=11 // pred_check_branch
        %136 = sbr.rel (%p134) target = $region16
      $region15: #{denoiser_forward.5} parent=11 // pred_region
        _
      $region16: #{denoiser_forward.5} parent=11 // pred_fallthru
        _
      // Predicated region
      $region17: #{denoiser_forward.5} parent=11 // pred_check
        %p137 = pneg %p91
      $region18: #{denoiser_forward.5} parent=11 // pred_check_branch
        %139 = sbr.rel (%p137) target = $region20
      $region19: #{denoiser_forward.5} parent=11 // pred_region
        _
      $region20: #{denoiser_forward.5} parent=11 // pred_fallthru
        _
    $region12: #{denoiser_forward.5} parent=5 // pred_fallthru
      _
    %p140 = scmp.lt.s32.totalorder %s9, 4
    // Predicated region
    $region21: #{denoiser_forward.5} parent=5 // pred_check
      %p141 = pneg %p140
    $region22: #{denoiser_forward.5} parent=5 // pred_check_branch
      %143 = sbr.rel (%p141) target = $region24
    $region23: #{denoiser_forward.5} parent=5 // pred_region
      // Predicated region
      $region25: #{denoiser_forward.5} parent=23 // pred_check
        %p144 = pneg %p43
      $region26: #{denoiser_forward.5} parent=23 // pred_check_branch
        %146 = sbr.rel (%p144) target = $region28
      $region27: #{denoiser_forward.5} parent=23 // pred_region
        %s147 = smul.u32 4, %s17
        %p148 = scmp.lt.s32.totalorder %s16, 3
        %s149 = scalar_select %p148, %s16, 3
        %p150 = scmp.lt.s32.totalorder %s147, 3
        %s151 = scalar_select %p150, %s147, 3
        %s152 = smul.addr %s149, 4
        %s153 = sadd.s32 %s151, %s152
        %s154 = smul.addr %s153, 8
        %s155 = scalar_lea.vmem %s0, %s154
        %s156 = smul.u32 4, %s17
      $region28: #{denoiser_forward.5} parent=23 // pred_fallthru
        _
    $region24: #{denoiser_forward.5} parent=5 // pred_fallthru
      _
    %p157 = scmp.le.s32.totalorder 1, %s9
    %p158 = scmp.lt.s32.totalorder %s9, 5
    %p159 = pnand %p157, %p158
    %p160 = pneg %p159
    // Predicated region
    $region29: #{denoiser_forward.5} parent=5 // pred_check
      _
    $region30: #{denoiser_forward.5} parent=5 // pred_check_branch
      %162 = sbr.rel (%p159) target = $region32
    $region31: #{denoiser_forward.5} parent=5 // pred_region
      %s163 = ssub.s32 %s9, 1
      %s164 = smul.u32 4, %s19
      %p165 = scmp.lt.s32.totalorder %s18, 3
      %s166 = scalar_select %p165, %s18, 3
      %p167 = scmp.lt.s32.totalorder %s164, 3
      %s168 = scalar_select %p167, %s164, 3
      %s169 = smul.addr %s166, 4
      %s170 = sadd.s32 %s168, %s169
      %s171 = smul.addr %s170, 8
      %s172 = scalar_lea.vmem %s0, %s171
      %p173 = pneg %p49
      %p174 = pneg %p46
      %p175 = pneg %p70
      %p176 = pneg %p67
      %p177 = pneg %p91
      %p178 = pneg %p88
      %p179 = pneg %p119
      %p180 = pneg %p116
      %s181 = smul.u32 4, %s19
      %p182 = scmp.lt.s32.totalorder %s18, 3
      %s183 = scalar_select %p182, %s18, 3
      %p184 = scmp.lt.s32.totalorder %s181, 3
      %s185 = scalar_select %p184, %s181, 3
      %s186 = smul.addr %s183, 4
      %s187 = sadd.s32 %s185, %s186
      %s188 = smul.addr %s187, 8
      %s189 = scalar_lea.vmem %s3, %s188
      %s190 = smul.u32 4, %s19
      %p191 = scmp.lt.s32.totalorder %s18, 3
      %s192 = scalar_select %p191, %s18, 3
      %p193 = scmp.lt.s32.totalorder %s190, 3
      %s194 = scalar_select %p193, %s190, 3
      %s195 = smul.addr %s192, 4
      %s196 = sadd.s32 %s194, %s195
      %s197 = smul.addr %s196, 8
      %s198 = scalar_lea.vmem %s0, %s197
      %s199 = smul.u32 4, %s19
      %s200 = smul.u32 4, %s19
      %p201 = scmp.lt.s32.totalorder %s18, 3
      %s202 = scalar_select %p201, %s18, 3
      %p203 = scmp.lt.s32.totalorder %s200, 3
      %s204 = scalar_select %p203, %s200, 3
      %s205 = smul.addr %s202, 4
      %s206 = sadd.s32 %s204, %s205
      %s207 = smul.addr %s206, 8
      %s208 = scalar_lea.vmem %s3, %s207
      %s209 = smul.u32 4, %s19
      %p210 = scmp.eq.s32.totalorder %s19, 0
      // Predicated region
      $region33: #{denoiser_forward.5} parent=31 // pred_check
        %p211 = pneg %p210
      $region34: #{denoiser_forward.5} parent=31 // pred_check_branch
        %213 = sbr.rel (%p211) target = $region36
      $region35: #{denoiser_forward.5} parent=31 // pred_region
        %vm214 = vcmask 8192
        %215 = vst.msk [vmem:[#allocation2] sm:$0x1] %vm214, 0.0
      $region36: #{denoiser_forward.5} parent=31 // pred_fallthru
        _
      %v216 = vld [vmem:[%s198] sm:$0xff]
      %v217 = vld [vmem:[%s198 + $0x8] sm:$0xff]
      %v218 = vld [vmem:[%s198 + $0x10] sm:$0xff]
      %v219 = vld [vmem:[%s198 + $0x18] sm:$0xff]
      %v220 = vlaneseq
      %v221 = vshrl.u32 %v220, 7
      %v222 = vadd.s32 %v221, 8
      %v223 = vadd.s32 %v221, 16
      %v224 = vadd.s32 %v221, 24
      %s225 = smul.u32 %s19, 32
      %v226 = vstv %s225
      %v227 = vadd.s32 %v226, %v221
      %v228 = vadd.s32 %v226, %v222
      %v229 = vadd.s32 %v226, %v223
      %v230 = vadd.s32 %v226, %v224
      %vm231 = vcmp.lt.s32.totalorder %v227, 32
      %vm232 = vcmp.lt.s32.totalorder %v228, 32
      %vm233 = vcmp.lt.s32.totalorder %v229, 32
      %vm234 = vcmp.lt.s32.totalorder %v230, 32
      %v235 = vsel %vm231, 1, 0
      %v236 = vsel %vm232, 1, 0
      %v237 = vsel %vm233, 1, 0
      %v238 = vsel %vm234, 1, 0
      %vm239 = vcmp.eq.s32.totalorder %v235, 1
      %vm240 = vcmp.eq.s32.totalorder %v236, 1
      %vm241 = vcmp.eq.s32.totalorder %v237, 1
      %vm242 = vcmp.eq.s32.totalorder %v238, 1
      %v243 = vsel %vm239, %v216, 0.0
      %v244 = vsel %vm240, %v217, 0.0
      %v245 = vsel %vm241, %v218, 0.0
      %v246 = vsel %vm242, %v219, 0.0
      %vm247 = vcmask 64512
      %v248 = vsel %vm247, %v243, 0.0
      %249 = vadd.xlane.f32.xlu0 %v248
      %v250 = vpop.xlane.xlu0 %249
      %v251 = vsel %vm247, %v244, 0.0
      %252 = vadd.xlane.f32.xlu0 %v251
      %v253 = vpop.xlane.xlu0 %252
      %v254 = vsel %vm247, %v245, 0.0
      %255 = vadd.xlane.f32.xlu0 %v254
      %v256 = vpop.xlane.xlu0 %255
      %v257 = vsel %vm247, %v246, 0.0
      %258 = vadd.xlane.f32.xlu0 %v257
      %v259 = vpop.xlane.xlu0 %258
      %v260 = vmul.f32 %v243, %v243
      %v261 = vmul.f32 %v244, %v244
      %v262 = vmul.f32 %v245, %v245
      %v263 = vmul.f32 %v246, %v246
      %v264 = vsel %vm247, %v260, 0.0
      %265 = vadd.xlane.f32.xlu0 %v264
      %v266 = vpop.xlane.xlu0 %265
      %v267 = vsel %vm247, %v261, 0.0
      %268 = vadd.xlane.f32.xlu0 %v267
      %v269 = vpop.xlane.xlu0 %268
      %v270 = vsel %vm247, %v262, 0.0
      %271 = vadd.xlane.f32.xlu0 %v270
      %v272 = vpop.xlane.xlu0 %271
      %v273 = vsel %vm247, %v263, 0.0
      %274 = vadd.xlane.f32.xlu0 %v273
      %v275 = vpop.xlane.xlu0 %274
      %vm276 = vcmask 7168
      %v277 = vsel %vm276, %v250, %v266
      %v278 = vsel %vm276, %v253, %v269
      %v279 = vsel %vm276, %v256, %v272
      %v280 = vsel %vm276, %v259, %v275
      %v281 = vlaneseq
      %v282 = vand.u32 %v281, 127
      %vm283 = vcmp.le.s32.totalorder %v282, %v221
      %vm284 = vcmp.le.s32.totalorder %v282, %v222
      %vm285 = vcmp.le.s32.totalorder %v282, %v223
      %vm286 = vcmp.le.s32.totalorder %v282, %v224
      %v287 = vsel %vm283, 1, 0
      %v288 = vsel %vm284, 1, 0
      %v289 = vsel %vm285, 1, 0
      %v290 = vsel %vm286, 1, 0
      %v291 = vcvt.s32.f32 %v287
      %v292 = vcvt.s32.f32 %v288
      %v293 = vcvt.s32.f32 %v289
      %v294 = vcvt.s32.f32 %v290
      %v295 = vld [vmem:[#allocation2] sm:$0x1]
      %v297 = vperm.slane %v295, 0
      %vm299 = vcmask 261120
      %v301 = vsel %vm299, %v291, 0
      %v304 = vsel %vm299, %v292, 0
      %v307 = vsel %vm299, %v293, 0
      %v310 = vsel %vm299, %v294, 0
      %312 = vmatpush.msra.mxu0 0.0
      %313 = vmatpush.msra.mxu0 0.0
      %314 = vmatpush.msra.mxu0 0.0
      %315 = vmatpush.msra.mxu0 0.0
      %316 = vmatpush.msra.mxu0 0.0
      %317 = vmatpush.msra.mxu0 0.0
      %318 = vmatpush.msra.mxu0 0.0
      %319 = vmatpush.msra.mxu0 0.0
      %320 = vmatpush.msra.mxu0 0.0
      %321 = vmatpush.msra.mxu0 0.0
      %322 = vmatpush.msra.mxu0 0.0
      %323 = vmatpush.msra.mxu0 0.0
      %324 = vmatpush.msra.mxu0 %v280
      %325 = vmatpush.msra.mxu0 %v279
      %326 = vmatpush.msra.mxu0 %v278
      %327 = vmatpush.msra.mxu0 %v277
      %328 = vmatmul.f32.gmra.mxu0 %v301
      %v329 = vpop.f32.mrf.mxu0
      %v330 = vadd.f32 %v297, %v329
      %331 = vmatmul.f32.gmra.mxu0 %v304
      %v332 = vpop.f32.mrf.mxu0
      %v333 = vadd.f32 %v297, %v332
      %334 = vmatmul.f32.gmra.mxu0 %v307
      %v335 = vpop.f32.mrf.mxu0
      %v336 = vadd.f32 %v297, %v335
      %337 = vmatmul.f32.gmra.mxu0 %v310
      %v338 = vpop.f32.mrf.mxu0
      %v339 = vadd.f32 %v297, %v338
      %340 = vdwg.mxu0
      %vm341 = vcmask 15360
      %v342 = vsel %vm341, %v277, 0.0
      %v343 = vsel %vm341, %v278, 0.0
      %v344 = vadd.f32 %v342, %v343
      %v345 = vsel %vm341, %v279, 0.0
      %v346 = vadd.f32 %v344, %v345
      %v347 = vsel %vm341, %v280, 0.0
      %v348 = vadd.f32 %v346, %v347
      %v349 = vrot.slane %v348, 4
      %v350 = vadd.f32 %v348, %v349
      %v351 = vrot.slane %v350, 2
      %v352 = vadd.f32 %v350, %v351
      %v353 = vrot.slane %v352, 1
      %v354 = vadd.f32 %v352, %v353
      %v355 = vadd.f32 %v295, %v354
      %vm356 = vcmask 8192
      %357 = vst.msk [vmem:[#allocation2] sm:$0x1] %vm356, %v355
      %v358 = vadd.s32 %v227, 1
      %v359 = vadd.s32 %v228, 1
      %v360 = vadd.s32 %v229, 1
      %v361 = vadd.s32 %v230, 1
      %v362 = vcvt.s32.f32 %v358
      %v363 = vcvt.s32.f32 %v359
      %v364 = vcvt.s32.f32 %v360
      %v365 = vcvt.s32.f32 %v361
      %v366 = vmul.f32 %v362, 8.0
      %v367 = vmul.f32 %v363, 8.0
      %v368 = vmul.f32 %v364, 8.0
      %v369 = vmul.f32 %v365, 8.0
      %v370 = vrcp.pop %v366
      %v371 = vmul.f32 %v366, %v370
      %v372 = vsub.f32 1.0, %v371
      %v373 = vmul.f32 %v370, %v372
      %v374 = vadd.f32 %v370, %v373
      %vm375 = vweird.f32 %v366
      %vm376 = vweird.f32 %v370
      %vm377 = vmor %vm375, %vm376
      %v378 = vsel %vm377, %v370, %v374
      %v379 = vand.u32 2147483647, %v366
      %vm380 = vcmp.eq.f32.partialorder %v379, 8.507059e+37
      %v381 = vand.u32 %v366, 2147483648
      %v382 = vor.u32 1.1754944e-38, %v381
      %v383 = vsel %vm380, %v382, %v378
      %v384 = vmul.f32 %v330, %v383
      %v385 = vrcp.pop %v367
      %v386 = vmul.f32 %v367, %v385
      %v387 = vsub.f32 1.0, %v386
      %v388 = vmul.f32 %v385, %v387
      %v389 = vadd.f32 %v385, %v388
      %vm390 = vweird.f32 %v367
      %vm391 = vweird.f32 %v385
      %vm392 = vmor %vm390, %vm391
      %v393 = vsel %vm392, %v385, %v389
      %v394 = vand.u32 2147483647, %v367
      %vm395 = vcmp.eq.f32.partialorder %v394, 8.507059e+37
      %v396 = vand.u32 %v367, 2147483648
      %v397 = vor.u32 1.1754944e-38, %v396
      %v398 = vsel %vm395, %v397, %v393
      %v399 = vmul.f32 %v333, %v398
      %v400 = vrcp.pop %v368
      %v401 = vmul.f32 %v368, %v400
      %v402 = vsub.f32 1.0, %v401
      %v403 = vmul.f32 %v400, %v402
      %v404 = vadd.f32 %v400, %v403
      %vm405 = vweird.f32 %v368
      %vm406 = vweird.f32 %v400
      %vm407 = vmor %vm405, %vm406
      %v408 = vsel %vm407, %v400, %v404
      %v409 = vand.u32 2147483647, %v368
      %vm410 = vcmp.eq.f32.partialorder %v409, 8.507059e+37
      %v411 = vand.u32 %v368, 2147483648
      %v412 = vor.u32 1.1754944e-38, %v411
      %v413 = vsel %vm410, %v412, %v408
      %v414 = vmul.f32 %v336, %v413
      %v415 = vrcp.pop %v369
      %v416 = vmul.f32 %v369, %v415
      %v417 = vsub.f32 1.0, %v416
      %v418 = vmul.f32 %v415, %v417
      %v419 = vadd.f32 %v415, %v418
      %vm420 = vweird.f32 %v369
      %vm421 = vweird.f32 %v415
      %vm422 = vmor %vm420, %vm421
      %v423 = vsel %vm422, %v415, %v419
      %v424 = vand.u32 2147483647, %v369
      %vm425 = vcmp.eq.f32.partialorder %v424, 8.507059e+37
      %v426 = vand.u32 %v369, 2147483648
      %v427 = vor.u32 1.1754944e-38, %v426
      %v428 = vsel %vm425, %v427, %v423
      %v429 = vmul.f32 %v339, %v428
      %v430 = vmul.f32 %v384, %v384
      %v431 = vmul.f32 %v399, %v399
      %v432 = vmul.f32 %v414, %v414
      %v433 = vmul.f32 %v429, %v429
      %438 = vrot.lane.b32.xlu0 %v430, 1
      %v439 = vpop.permute.xlu0 %438
      %440 = vrot.lane.b32.xlu0 %v431, 1
      %v441 = vpop.permute.xlu0 %440
      %442 = vrot.lane.b32.xlu0 %v432, 1
      %v443 = vpop.permute.xlu0 %442
      %444 = vrot.lane.b32.xlu0 %v433, 1
      %v445 = vpop.permute.xlu0 %444
      %v450 = vsub.f32 %v384, %v439
      %v451 = vsub.f32 %v399, %v441
      %v452 = vsub.f32 %v414, %v443
      %v453 = vsub.f32 %v429, %v445
      %v454 = vmax.f32 %v450, 0.0
      %v455 = vmax.f32 %v451, 0.0
      %v456 = vmax.f32 %v452, 0.0
      %v457 = vmax.f32 %v453, 0.0
      %459 = vset.pattern.permute.xlu0 0
      %460 = vperm.xlu0 %459, %v384
      %v461 = vpop.permute.xlu0 %460
      %464 = vset.pattern.permute.xlu0 0
      %465 = vperm.xlu0 %464, %v399
      %v466 = vpop.permute.xlu0 %465
      %469 = vset.pattern.permute.xlu0 0
      %470 = vperm.xlu0 %469, %v414
      %v471 = vpop.permute.xlu0 %470
      %474 = vset.pattern.permute.xlu0 0
      %475 = vperm.xlu0 %474, %v429
      %v476 = vpop.permute.xlu0 %475
      %v478 = vsub.f32 %v243, %v461
      %v479 = vsub.f32 %v244, %v466
      %v480 = vsub.f32 %v245, %v471
      %v481 = vsub.f32 %v246, %v476
      %v482 = vrsqrt.pop %v454
      %v483 = vmul.f32 %v482, %v454
      %v484 = vmul.f32 %v483, %v482
      %v485 = vmul.f32 0.5, %v484
      %v486 = vsub.f32 1.5, %v485
      %v487 = vmul.f32 %v482, %v486
      %v488 = vmul.f32 %v454, %v487
      %vm489 = vcmp.eq.f32.partialorder %v454, inf
      %v490 = vsel %vm489, %v454, %v488
      %vm491 = vcmp.eq.f32.partialorder %v454, 0.0
      %v492 = vand.u32 %v454, 2147483648
      %v493 = vsel %vm491, %v492, %v490
      %v494 = vrsqrt.pop %v455
      %v495 = vmul.f32 %v494, %v455
      %v496 = vmul.f32 %v495, %v494
      %v497 = vmul.f32 0.5, %v496
      %v498 = vsub.f32 1.5, %v497
      %v499 = vmul.f32 %v494, %v498
      %v500 = vmul.f32 %v455, %v499
      %vm501 = vcmp.eq.f32.partialorder %v455, inf
      %v502 = vsel %vm501, %v455, %v500
      %vm503 = vcmp.eq.f32.partialorder %v455, 0.0
      %v504 = vand.u32 %v455, 2147483648
      %v505 = vsel %vm503, %v504, %v502
      %v506 = vrsqrt.pop %v456
      %v507 = vmul.f32 %v506, %v456
      %v508 = vmul.f32 %v507, %v506
      %v509 = vmul.f32 0.5, %v508
      %v510 = vsub.f32 1.5, %v509
      %v511 = vmul.f32 %v506, %v510
      %v512 = vmul.f32 %v456, %v511
      %vm513 = vcmp.eq.f32.partialorder %v456, inf
      %v514 = vsel %vm513, %v456, %v512
      %vm515 = vcmp.eq.f32.partialorder %v456, 0.0
      %v516 = vand.u32 %v456, 2147483648
      %v517 = vsel %vm515, %v516, %v514
      %v518 = vrsqrt.pop %v457
      %v519 = vmul.f32 %v518, %v457
      %v520 = vmul.f32 %v519, %v518
      %v521 = vmul.f32 0.5, %v520
      %v522 = vsub.f32 1.5, %v521
      %v523 = vmul.f32 %v518, %v522
      %v524 = vmul.f32 %v457, %v523
      %vm525 = vcmp.eq.f32.partialorder %v457, inf
      %v526 = vsel %vm525, %v457, %v524
      %vm527 = vcmp.eq.f32.partialorder %v457, 0.0
      %v528 = vand.u32 %v457, 2147483648
      %v529 = vsel %vm527, %v528, %v526
      %v530 = vadd.f32 %v493, 1e-12
      %v531 = vadd.f32 %v505, 1e-12
      %v532 = vadd.f32 %v517, 1e-12
      %v533 = vadd.f32 %v529, 1e-12
      %535 = vset.pattern.permute.xlu0 1
      %536 = vperm.xlu0 %535, %v530
      %v537 = vpop.permute.xlu0 %536
      %540 = vset.pattern.permute.xlu0 1
      %541 = vperm.xlu0 %540, %v531
      %v542 = vpop.permute.xlu0 %541
      %545 = vset.pattern.permute.xlu0 1
      %546 = vperm.xlu0 %545, %v532
      %v547 = vpop.permute.xlu0 %546
      %550 = vset.pattern.permute.xlu0 1
      %551 = vperm.xlu0 %550, %v533
      %v552 = vpop.permute.xlu0 %551
      %v554 = vrcp.pop %v537
      %v555 = vmul.f32 %v537, %v554
      %v556 = vsub.f32 1.0, %v555
      %v557 = vmul.f32 %v554, %v556
      %v558 = vadd.f32 %v554, %v557
      %vm559 = vweird.f32 %v537
      %vm560 = vweird.f32 %v554
      %vm561 = vmor %vm559, %vm560
      %v562 = vsel %vm561, %v554, %v558
      %v563 = vand.u32 2147483647, %v537
      %vm564 = vcmp.eq.f32.partialorder %v563, 8.507059e+37
      %v565 = vand.u32 %v537, 2147483648
      %v566 = vor.u32 1.1754944e-38, %v565
      %v567 = vsel %vm564, %v566, %v562
      %v568 = vmul.f32 %v478, %v567
      %v569 = vrcp.pop %v542
      %v570 = vmul.f32 %v542, %v569
      %v571 = vsub.f32 1.0, %v570
      %v572 = vmul.f32 %v569, %v571
      %v573 = vadd.f32 %v569, %v572
      %vm574 = vweird.f32 %v542
      %vm575 = vweird.f32 %v569
      %vm576 = vmor %vm574, %vm575
      %v577 = vsel %vm576, %v569, %v573
      %v578 = vand.u32 2147483647, %v542
      %vm579 = vcmp.eq.f32.partialorder %v578, 8.507059e+37
      %v580 = vand.u32 %v542, 2147483648
      %v581 = vor.u32 1.1754944e-38, %v580
      %v582 = vsel %vm579, %v581, %v577
      %v583 = vmul.f32 %v479, %v582
      %v584 = vrcp.pop %v547
      %v585 = vmul.f32 %v547, %v584
      %v586 = vsub.f32 1.0, %v585
      %v587 = vmul.f32 %v584, %v586
      %v588 = vadd.f32 %v584, %v587
      %vm589 = vweird.f32 %v547
      %vm590 = vweird.f32 %v584
      %vm591 = vmor %vm589, %vm590
      %v592 = vsel %vm591, %v584, %v588
      %v593 = vand.u32 2147483647, %v547
      %vm594 = vcmp.eq.f32.partialorder %v593, 8.507059e+37
      %v595 = vand.u32 %v547, 2147483648
      %v596 = vor.u32 1.1754944e-38, %v595
      %v597 = vsel %vm594, %v596, %v592
      %v598 = vmul.f32 %v480, %v597
      %v599 = vrcp.pop %v552
      %v600 = vmul.f32 %v552, %v599
      %v601 = vsub.f32 1.0, %v600
      %v602 = vmul.f32 %v599, %v601
      %v603 = vadd.f32 %v599, %v602
      %vm604 = vweird.f32 %v552
      %vm605 = vweird.f32 %v599
      %vm606 = vmor %vm604, %vm605
      %v607 = vsel %vm606, %v599, %v603
      %v608 = vand.u32 2147483647, %v552
      %vm609 = vcmp.eq.f32.partialorder %v608, 8.507059e+37
      %v610 = vand.u32 %v552, 2147483648
      %v611 = vor.u32 1.1754944e-38, %v610
      %v612 = vsel %vm609, %v611, %v607
      %v613 = vmul.f32 %v481, %v612
      %v614 = vld [vmem:[%s1] sm:$0x1]
      %v616 = vperm.slane %v614, 0
      %v618 = vmul.f32 %v568, %v616
      %v619 = vmul.f32 %v583, %v616
      %v620 = vmul.f32 %v598, %v616
      %v621 = vmul.f32 %v613, %v616
      %v622 = vld [vmem:[%s2] sm:$0x1]
      %v624 = vperm.slane %v622, 0
      %v626 = vadd.f32 %v618, %v624
      %v627 = vadd.f32 %v619, %v624
      %v628 = vadd.f32 %v620, %v624
      %v629 = vadd.f32 %v621, %v624
      %630 = vst.msk [vmem:[%s208] sm:$0xff] %vm247, %v626
      %631 = vst.msk [vmem:[%s208 + $0x8] sm:$0xff] %vm247, %v627
      %632 = vst.msk [vmem:[%s208 + $0x10] sm:$0xff] %vm247, %v628
      %633 = vst.msk [vmem:[%s208 + $0x18] sm:$0xff] %vm247, %v629
      %s634 = smul.u32 4, %s19
      %p635 = scmp.lt.s32.totalorder %s18, 3
      %s636 = scalar_select %p635, %s18, 3
      %p637 = scmp.lt.s32.totalorder %s634, 3
      %s638 = scalar_select %p637, %s634, 3
      %s639 = smul.addr %s636, 4
      %s640 = sadd.s32 %s638, %s639
      %s641 = smul.addr %s640, 8
      %s642 = scalar_lea.vmem %s3, %s641
      // Predicated region
      $region37: #{denoiser_forward.5} parent=31 // pred_check
        %p643 = pneg %p116
      $region38: #{denoiser_forward.5} parent=31 // pred_check_branch
        %645 = sbr.rel (%p643) target = $region40
      $region39: #{denoiser_forward.5} parent=31 // pred_region
        %s646 = smul.u32 4, %s19
      $region40: #{denoiser_forward.5} parent=31 // pred_fallthru
        _
    $region32: #{denoiser_forward.5} parent=5 // pred_fallthru
      _
    %p647 = scmp.le.s32.totalorder 2, %s9
    // Predicated region
    $region41: #{denoiser_forward.5} parent=5 // pred_check
      %p648 = pneg %p647
    $region42: #{denoiser_forward.5} parent=5 // pred_check_branch
      %650 = sbr.rel (%p648) target = $region44
    $region43: #{denoiser_forward.5} parent=5 // pred_region
      %s651 = ssub.s32 %s9, 2
      // Predicated region
      $region45: #{denoiser_forward.5} parent=43 // pred_check
        %p652 = pneg %p122
      $region46: #{denoiser_forward.5} parent=43 // pred_check_branch
        %654 = sbr.rel (%p652) target = $region48
      $region47: #{denoiser_forward.5} parent=43 // pred_region
        %s655 = smul.u32 4, %s21
        %p656 = scmp.lt.s32.totalorder %s20, 3
        %s657 = scalar_select %p656, %s20, 3
        %p658 = scmp.lt.s32.totalorder %s655, 3
        %s659 = scalar_select %p658, %s655, 3
        %s660 = smul.addr %s657, 4
        %s661 = sadd.s32 %s659, %s660
        %s662 = smul.addr %s661, 8
        %s663 = scalar_lea.vmem %s3, %s662
      $region48: #{denoiser_forward.5} parent=43 // pred_fallthru
        _
    $region44: #{denoiser_forward.5} parent=5 // pred_fallthru
      _
  $region6: #{denoiser_forward.5} parent=0 // loop_footer
    %s13 = sadd.s32 1, %s9
  $region7: #{denoiser_forward.5} parent=0 // loop_footer_branch
    %8 = sbr.rel target = $region3
  $region8: #{denoiser_forward.5} parent=0 // loop_exit
    _

// kernel: denoiser_forward.8
$region0: #{denoiser_forward.8}
  #allocation0 [shape = 'u32[]', space=smem, size = 0x4, offset = 0x4, fixed_abs, tag = 'smem constant byte address 0x4 - core index']
  #allocation1 [shape = 'u32[72,128]{1,0:T(1,128)}', space=vmem, size = 0x9000, scoped, tag = 'internal scratch']
  %s0 = inlined_call_operand.vmem [shape: f32[128,32], index: 0, kind: input, shape index: {}]
  %s1 = inlined_call_operand.vmem [shape: f32[32,32], index: 1, kind: input, shape index: {}]
  %s2 = inlined_call_operand.vmem [shape: f32[1,32], index: 2, kind: input, shape index: {}]
  %s3 = inlined_call_operand.vmem [shape: f32[32,8], index: 3, kind: input, shape index: {}]
  %s4 = inlined_call_operand.vmem [shape: f32[1,8], index: 4, kind: input, shape index: {}]
  %s5 = inlined_call_operand.vmem [shape: f32[128,8], index: 5, kind: output, shape index: {}]
  %s6 = sld [smem:[#allocation0]]
  $region30: #{denoiser_forward.8} parent=0
    _
  %s8 = ssub.s32 1, %s6
  %s9 = scalar_select 0, %s8, %s6
  // Predicated region
  $region2: #{denoiser_forward.8} parent=0 // pred_check
    _
  $region3: #{denoiser_forward.8} parent=0 // pred_check_branch
    %11 = sbr.rel (0) target = $region5
  $region4: #{denoiser_forward.8} parent=0 // pred_region
    _
  $region5: #{denoiser_forward.8} parent=0 // pred_fallthru
    _
  // Predicated region
  $region6: #{denoiser_forward.8} parent=0 // pred_check
    _
  $region7: #{denoiser_forward.8} parent=0 // pred_check_branch
    %13 = sbr.rel (0) target = $region9
  $region8: #{denoiser_forward.8} parent=0 // pred_region
    _
  $region9: #{denoiser_forward.8} parent=0 // pred_fallthru
    _
  // Predicated region
  $region10: #{denoiser_forward.8} parent=0 // pred_check
    _
  $region11: #{denoiser_forward.8} parent=0 // pred_check_branch
    %15 = sbr.rel (0) target = $region13
  $region12: #{denoiser_forward.8} parent=0 // pred_region
    _
  $region13: #{denoiser_forward.8} parent=0 // pred_fallthru
    _
  // Predicated region
  $region14: #{denoiser_forward.8} parent=0 // pred_check
    _
  $region15: #{denoiser_forward.8} parent=0 // pred_check_branch
    %17 = sbr.rel (0) target = $region17
  $region16: #{denoiser_forward.8} parent=0 // pred_region
    _
  $region17: #{denoiser_forward.8} parent=0 // pred_fallthru
    _
  // Predicated region
  $region18: #{denoiser_forward.8} parent=0 // pred_check
    _
  $region19: #{denoiser_forward.8} parent=0 // pred_check_branch
    %19 = sbr.rel (0) target = $region21
  $region20: #{denoiser_forward.8} parent=0 // pred_region
    _
  $region21: #{denoiser_forward.8} parent=0 // pred_fallthru
    _
  %v20 = vld [vmem:[%s0] sm:$0xff]
  %v21 = vld [vmem:[%s0 + $0x8] sm:$0xff]
  %v22 = vld [vmem:[%s0 + $0x10] sm:$0xff]
  %v23 = vld [vmem:[%s0 + $0x18] sm:$0xff]
  %v24 = vld [vmem:[%s0 + $0x20] sm:$0xff]
  %v25 = vld [vmem:[%s0 + $0x28] sm:$0xff]
  %v26 = vld [vmem:[%s0 + $0x30] sm:$0xff]
  %v27 = vld [vmem:[%s0 + $0x38] sm:$0xff]
  %v28 = vld [vmem:[%s0 + $0x40] sm:$0xff]
  %v29 = vld [vmem:[%s0 + $0x48] sm:$0xff]
  %v30 = vld [vmem:[%s0 + $0x50] sm:$0xff]
  %v31 = vld [vmem:[%s0 + $0x58] sm:$0xff]
  %v32 = vld [vmem:[%s0 + $0x60] sm:$0xff]
  %v33 = vld [vmem:[%s0 + $0x68] sm:$0xff]
  %v34 = vld [vmem:[%s0 + $0x70] sm:$0xff]
  %v35 = vld [vmem:[%s0 + $0x78] sm:$0xff]
  %v36 = vld [vmem:[%s1] sm:$0xff]
  %v37 = vld [vmem:[%s1 + $0x8] sm:$0xff]
  %v38 = vld [vmem:[%s1 + $0x10] sm:$0xff]
  %v39 = vld [vmem:[%s1 + $0x18] sm:$0xff]
  %v40 = vld [vmem:[%s2] sm:$0x1]
  %v42 = vperm.slane %v40, 0
  %vm44 = vcmask 261120
  %v46 = vsel %vm44, %v20, 0
  %v49 = vsel %vm44, %v21, 0
  %v52 = vsel %vm44, %v22, 0
  %v55 = vsel %vm44, %v23, 0
  %v58 = vsel %vm44, %v24, 0
  %v61 = vsel %vm44, %v25, 0
  %v64 = vsel %vm44, %v26, 0
  %v67 = vsel %vm44, %v27, 0
  %v70 = vsel %vm44, %v28, 0
  %v73 = vsel %vm44, %v29, 0
  %v76 = vsel %vm44, %v30, 0
  %v79 = vsel %vm44, %v31, 0
  %v82 = vsel %vm44, %v32, 0
  %v85 = vsel %vm44, %v33, 0
  %v88 = vsel %vm44, %v34, 0
  %v91 = vsel %vm44, %v35, 0
  %93 = vmatpush.msra.mxu0 0.0
  %94 = vmatpush.msra.mxu0 0.0
  %95 = vmatpush.msra.mxu0 0.0
  %96 = vmatpush.msra.mxu0 0.0
  %97 = vmatpush.msra.mxu0 0.0
  %98 = vmatpush.msra.mxu0 0.0
  %99 = vmatpush.msra.mxu0 0.0
  %100 = vmatpush.msra.mxu0 0.0
  %101 = vmatpush.msra.mxu0 0.0
  %102 = vmatpush.msra.mxu0 0.0
  %103 = vmatpush.msra.mxu0 0.0
  %104 = vmatpush.msra.mxu0 0.0
  %105 = vmatpush.msra.mxu0 %v39
  %106 = vmatpush.msra.mxu0 %v38
  %107 = vmatpush.msra.mxu0 %v37
  %108 = vmatpush.msra.mxu0 %v36
  %109 = vmatmul.f32.gmra.mxu0 %v46
  %v110 = vpop.f32.mrf.mxu0
  %v111 = vadd.f32 %v42, %v110
  %112 = vmatmul.f32.gmra.mxu0 %v49
  %v113 = vpop.f32.mrf.mxu0
  %v114 = vadd.f32 %v42, %v113
  %115 = vmatmul.f32.gmra.mxu0 %v52
  %v116 = vpop.f32.mrf.mxu0
  %v117 = vadd.f32 %v42, %v116
  %118 = vmatmul.f32.gmra.mxu0 %v55
  %v119 = vpop.f32.mrf.mxu0
  %v120 = vadd.f32 %v42, %v119
  %121 = vmatmul.f32.gmra.mxu0 %v58
  %v122 = vpop.f32.mrf.mxu0
  %v123 = vadd.f32 %v42, %v122
  %124 = vmatmul.f32.gmra.mxu0 %v61
  %v125 = vpop.f32.mrf.mxu0
  %v126 = vadd.f32 %v42, %v125
  %127 = vmatmul.f32.gmra.mxu0 %v64
  %v128 = vpop.f32.mrf.mxu0
  %v129 = vadd.f32 %v42, %v128
  %130 = vmatmul.f32.gmra.mxu0 %v67
  %v131 = vpop.f32.mrf.mxu0
  %v132 = vadd.f32 %v42, %v131
  %133 = vmatmul.f32.gmra.mxu0 %v70
  %v134 = vpop.f32.mrf.mxu0
  %v135 = vadd.f32 %v42, %v134
  %136 = vmatmul.f32.gmra.mxu0 %v73
  %v137 = vpop.f32.mrf.mxu0
  %v138 = vadd.f32 %v42, %v137
  %139 = vmatmul.f32.gmra.mxu0 %v76
  %v140 = vpop.f32.mrf.mxu0
  %v141 = vadd.f32 %v42, %v140
  %142 = vmatmul.f32.gmra.mxu0 %v79
  %v143 = vpop.f32.mrf.mxu0
  %v144 = vadd.f32 %v42, %v143
  %145 = vmatmul.f32.gmra.mxu0 %v82
  %v146 = vpop.f32.mrf.mxu0
  %v147 = vadd.f32 %v42, %v146
  %148 = vmatmul.f32.gmra.mxu0 %v85
  %v149 = vpop.f32.mrf.mxu0
  %v150 = vadd.f32 %v42, %v149
  %151 = vmatmul.f32.gmra.mxu0 %v88
  %v152 = vpop.f32.mrf.mxu0
  %v153 = vadd.f32 %v42, %v152
  %154 = vmatmul.f32.gmra.mxu0 %v91
  %v155 = vpop.f32.mrf.mxu0
  %v156 = vadd.f32 %v42, %v155
  %157 = vdwg.mxu0
  %v158 = vxor.u32 %v111, 2147483648
  %v159 = vxor.u32 %v114, 2147483648
  %v160 = vxor.u32 %v117, 2147483648
  %v161 = vxor.u32 %v120, 2147483648
  %v162 = vxor.u32 %v123, 2147483648
  %v163 = vxor.u32 %v126, 2147483648
  %v164 = vxor.u32 %v129, 2147483648
  %v165 = vxor.u32 %v132, 2147483648
  %v166 = vxor.u32 %v135, 2147483648
  %v167 = vxor.u32 %v138, 2147483648
  %v168 = vxor.u32 %v141, 2147483648
  %v169 = vxor.u32 %v144, 2147483648
  %v170 = vxor.u32 %v147, 2147483648
  %v171 = vxor.u32 %v150, 2147483648
  %v172 = vxor.u32 %v153, 2147483648
  %v173 = vxor.u32 %v156, 2147483648
  %v174 = vmul.f32 %v158, 1.442695
  %v175 = vpow.pop %v174
  %v176 = vmul.f32 %v159, 1.442695
  %v177 = vpow.pop %v176
  %v178 = vmul.f32 %v160, 1.442695
  %v179 = vpow.pop %v178
  %v180 = vmul.f32 %v161, 1.442695
  %v181 = vpow.pop %v180
  %v182 = vmul.f32 %v162, 1.442695
  %v183 = vpow.pop %v182
  %v184 = vmul.f32 %v163, 1.442695
  %v185 = vpow.pop %v184
  %v186 = vmul.f32 %v164, 1.442695
  %v187 = vpow.pop %v186
  %v188 = vmul.f32 %v165, 1.442695
  %v189 = vpow.pop %v188
  %v190 = vmul.f32 %v166, 1.442695
  %v191 = vpow.pop %v190
  %v192 = vmul.f32 %v167, 1.442695
  %v193 = vpow.pop %v192
  %v194 = vmul.f32 %v168, 1.442695
  %v195 = vpow.pop %v194
  %v196 = vmul.f32 %v169, 1.442695
  %v197 = vpow.pop %v196
  %v198 = vmul.f32 %v170, 1.442695
  %v199 = vpow.pop %v198
  %v200 = vmul.f32 %v171, 1.442695
  %v201 = vpow.pop %v200
  %v202 = vmul.f32 %v172, 1.442695
  %v203 = vpow.pop %v202
  %v204 = vmul.f32 %v173, 1.442695
  %v205 = vpow.pop %v204
  %v206 = vadd.f32 %v175, 1.0
  %v207 = vadd.f32 %v177, 1.0
  %v208 = vadd.f32 %v179, 1.0
  %v209 = vadd.f32 %v181, 1.0
  %v210 = vadd.f32 %v183, 1.0
  %v211 = vadd.f32 %v185, 1.0
  %v212 = vadd.f32 %v187, 1.0
  %v213 = vadd.f32 %v189, 1.0
  %v214 = vadd.f32 %v191, 1.0
  %v215 = vadd.f32 %v193, 1.0
  %v216 = vadd.f32 %v195, 1.0
  %v217 = vadd.f32 %v197, 1.0
  %v218 = vadd.f32 %v199, 1.0
  %v219 = vadd.f32 %v201, 1.0
  %v220 = vadd.f32 %v203, 1.0
  %v221 = vadd.f32 %v205, 1.0
  %v222 = vrcp.pop %v206
  %v223 = vmul.f32 %v206, %v222
  %v224 = vsub.f32 1.0, %v223
  %v225 = vmul.f32 %v222, %v224
  %v226 = vadd.f32 %v222, %v225
  %vm227 = vweird.f32 %v206
  %vm228 = vweird.f32 %v222
  %vm229 = vmor %vm227, %vm228
  %v230 = vsel %vm229, %v222, %v226
  %v231 = vand.u32 2147483647, %v206
  %vm232 = vcmp.eq.f32.partialorder %v231, 8.507059e+37
  %v233 = vand.u32 %v206, 2147483648
  %v234 = vor.u32 1.1754944e-38, %v233
  %v235 = vsel %vm232, %v234, %v230
  %v236 = vmul.f32 1.0, %v235
  %v237 = vrcp.pop %v207
  %v238 = vmul.f32 %v207, %v237
  %v239 = vsub.f32 1.0, %v238
  %v240 = vmul.f32 %v237, %v239
  %v241 = vadd.f32 %v237, %v240
  %vm242 = vweird.f32 %v207
  %vm243 = vweird.f32 %v237
  %vm244 = vmor %vm242, %vm243
  %v245 = vsel %vm244, %v237, %v241
  %v246 = vand.u32 2147483647, %v207
  %vm247 = vcmp.eq.f32.partialorder %v246, 8.507059e+37
  %v248 = vand.u32 %v207, 2147483648
  %v249 = vor.u32 1.1754944e-38, %v248
  %v250 = vsel %vm247, %v249, %v245
  %v251 = vmul.f32 1.0, %v250
  %v252 = vrcp.pop %v208
  %v253 = vmul.f32 %v208, %v252
  %v254 = vsub.f32 1.0, %v253
  %v255 = vmul.f32 %v252, %v254
  %v256 = vadd.f32 %v252, %v255
  %vm257 = vweird.f32 %v208
  %vm258 = vweird.f32 %v252
  %vm259 = vmor %vm257, %vm258
  %v260 = vsel %vm259, %v252, %v256
  %v261 = vand.u32 2147483647, %v208
  %vm262 = vcmp.eq.f32.partialorder %v261, 8.507059e+37
  %v263 = vand.u32 %v208, 2147483648
  %v264 = vor.u32 1.1754944e-38, %v263
  %v265 = vsel %vm262, %v264, %v260
  %v266 = vmul.f32 1.0, %v265
  %v267 = vrcp.pop %v209
  %v268 = vmul.f32 %v209, %v267
  %v269 = vsub.f32 1.0, %v268
  %v270 = vmul.f32 %v267, %v269
  %v271 = vadd.f32 %v267, %v270
  %vm272 = vweird.f32 %v209
  %vm273 = vweird.f32 %v267
  %vm274 = vmor %vm272, %vm273
  %v275 = vsel %vm274, %v267, %v271
  %v276 = vand.u32 2147483647, %v209
  %vm277 = vcmp.eq.f32.partialorder %v276, 8.507059e+37
  %v278 = vand.u32 %v209, 2147483648
  %v279 = vor.u32 1.1754944e-38, %v278
  %v280 = vsel %vm277, %v279, %v275
  %v281 = vmul.f32 1.0, %v280
  %v282 = vrcp.pop %v210
  %v283 = vmul.f32 %v210, %v282
  %v284 = vsub.f32 1.0, %v283
  %v285 = vmul.f32 %v282, %v284
  %v286 = vadd.f32 %v282, %v285
  %vm287 = vweird.f32 %v210
  %vm288 = vweird.f32 %v282
  %vm289 = vmor %vm287, %vm288
  %v290 = vsel %vm289, %v282, %v286
  %v291 = vand.u32 2147483647, %v210
  %vm292 = vcmp.eq.f32.partialorder %v291, 8.507059e+37
  %v293 = vand.u32 %v210, 2147483648
  %v294 = vor.u32 1.1754944e-38, %v293
  %v295 = vsel %vm292, %v294, %v290
  %v296 = vmul.f32 1.0, %v295
  %v297 = vrcp.pop %v211
  %v298 = vmul.f32 %v211, %v297
  %v299 = vsub.f32 1.0, %v298
  %v300 = vmul.f32 %v297, %v299
  %v301 = vadd.f32 %v297, %v300
  %vm302 = vweird.f32 %v211
  %vm303 = vweird.f32 %v297
  %vm304 = vmor %vm302, %vm303
  %v305 = vsel %vm304, %v297, %v301
  %v306 = vand.u32 2147483647, %v211
  %vm307 = vcmp.eq.f32.partialorder %v306, 8.507059e+37
  %v308 = vand.u32 %v211, 2147483648
  %v309 = vor.u32 1.1754944e-38, %v308
  %v310 = vsel %vm307, %v309, %v305
  %v311 = vmul.f32 1.0, %v310
  %v312 = vrcp.pop %v212
  %v313 = vmul.f32 %v212, %v312
  %v314 = vsub.f32 1.0, %v313
  %v315 = vmul.f32 %v312, %v314
  %v316 = vadd.f32 %v312, %v315
  %vm317 = vweird.f32 %v212
  %vm318 = vweird.f32 %v312
  %vm319 = vmor %vm317, %vm318
  %v320 = vsel %vm319, %v312, %v316
  %v321 = vand.u32 2147483647, %v212
  %vm322 = vcmp.eq.f32.partialorder %v321, 8.507059e+37
  %v323 = vand.u32 %v212, 2147483648
  %v324 = vor.u32 1.1754944e-38, %v323
  %v325 = vsel %vm322, %v324, %v320
  %v326 = vmul.f32 1.0, %v325
  %v327 = vrcp.pop %v213
  %v328 = vmul.f32 %v213, %v327
  %v329 = vsub.f32 1.0, %v328
  %v330 = vmul.f32 %v327, %v329
  %v331 = vadd.f32 %v327, %v330
  %vm332 = vweird.f32 %v213
  %vm333 = vweird.f32 %v327
  %vm334 = vmor %vm332, %vm333
  %v335 = vsel %vm334, %v327, %v331
  %v336 = vand.u32 2147483647, %v213
  %vm337 = vcmp.eq.f32.partialorder %v336, 8.507059e+37
  %v338 = vand.u32 %v213, 2147483648
  %v339 = vor.u32 1.1754944e-38, %v338
  %v340 = vsel %vm337, %v339, %v335
  %v341 = vmul.f32 1.0, %v340
  %v342 = vrcp.pop %v214
  %v343 = vmul.f32 %v214, %v342
  %v344 = vsub.f32 1.0, %v343
  %v345 = vmul.f32 %v342, %v344
  %v346 = vadd.f32 %v342, %v345
  %vm347 = vweird.f32 %v214
  %vm348 = vweird.f32 %v342
  %vm349 = vmor %vm347, %vm348
  %v350 = vsel %vm349, %v342, %v346
  %v351 = vand.u32 2147483647, %v214
  %vm352 = vcmp.eq.f32.partialorder %v351, 8.507059e+37
  %v353 = vand.u32 %v214, 2147483648
  %v354 = vor.u32 1.1754944e-38, %v353
  %v355 = vsel %vm352, %v354, %v350
  %v356 = vmul.f32 1.0, %v355
  %v357 = vrcp.pop %v215
  %v358 = vmul.f32 %v215, %v357
  %v359 = vsub.f32 1.0, %v358
  %v360 = vmul.f32 %v357, %v359
  %v361 = vadd.f32 %v357, %v360
  %vm362 = vweird.f32 %v215
  %vm363 = vweird.f32 %v357
  %vm364 = vmor %vm362, %vm363
  %v365 = vsel %vm364, %v357, %v361
  %v366 = vand.u32 2147483647, %v215
  %vm367 = vcmp.eq.f32.partialorder %v366, 8.507059e+37
  %v368 = vand.u32 %v215, 2147483648
  %v369 = vor.u32 1.1754944e-38, %v368
  %v370 = vsel %vm367, %v369, %v365
  %v371 = vmul.f32 1.0, %v370
  %v372 = vrcp.pop %v216
  %v373 = vmul.f32 %v216, %v372
  %v374 = vsub.f32 1.0, %v373
  %v375 = vmul.f32 %v372, %v374
  %v376 = vadd.f32 %v372, %v375
  %vm377 = vweird.f32 %v216
  %vm378 = vweird.f32 %v372
  %vm379 = vmor %vm377, %vm378
  %v380 = vsel %vm379, %v372, %v376
  %v381 = vand.u32 2147483647, %v216
  %vm382 = vcmp.eq.f32.partialorder %v381, 8.507059e+37
  %v383 = vand.u32 %v216, 2147483648
  %v384 = vor.u32 1.1754944e-38, %v383
  %v385 = vsel %vm382, %v384, %v380
  %v386 = vmul.f32 1.0, %v385
  %v387 = vrcp.pop %v217
  %v388 = vmul.f32 %v217, %v387
  %v389 = vsub.f32 1.0, %v388
  %v390 = vmul.f32 %v387, %v389
  %v391 = vadd.f32 %v387, %v390
  %vm392 = vweird.f32 %v217
  %vm393 = vweird.f32 %v387
  %vm394 = vmor %vm392, %vm393
  %v395 = vsel %vm394, %v387, %v391
  %v396 = vand.u32 2147483647, %v217
  %vm397 = vcmp.eq.f32.partialorder %v396, 8.507059e+37
  %v398 = vand.u32 %v217, 2147483648
  %v399 = vor.u32 1.1754944e-38, %v398
  %v400 = vsel %vm397, %v399, %v395
  %v401 = vmul.f32 1.0, %v400
  %v402 = vrcp.pop %v218
  %v403 = vmul.f32 %v218, %v402
  %v404 = vsub.f32 1.0, %v403
  %v405 = vmul.f32 %v402, %v404
  %v406 = vadd.f32 %v402, %v405
  %vm407 = vweird.f32 %v218
  %vm408 = vweird.f32 %v402
  %vm409 = vmor %vm407, %vm408
  %v410 = vsel %vm409, %v402, %v406
  %v411 = vand.u32 2147483647, %v218
  %vm412 = vcmp.eq.f32.partialorder %v411, 8.507059e+37
  %v413 = vand.u32 %v218, 2147483648
  %v414 = vor.u32 1.1754944e-38, %v413
  %v415 = vsel %vm412, %v414, %v410
  %v416 = vmul.f32 1.0, %v415
  %v417 = vrcp.pop %v219
  %v418 = vmul.f32 %v219, %v417
  %v419 = vsub.f32 1.0, %v418
  %v420 = vmul.f32 %v417, %v419
  %v421 = vadd.f32 %v417, %v420
  %vm422 = vweird.f32 %v219
  %vm423 = vweird.f32 %v417
  %vm424 = vmor %vm422, %vm423
  %v425 = vsel %vm424, %v417, %v421
  %v426 = vand.u32 2147483647, %v219
  %vm427 = vcmp.eq.f32.partialorder %v426, 8.507059e+37
  %v428 = vand.u32 %v219, 2147483648
  %v429 = vor.u32 1.1754944e-38, %v428
  %v430 = vsel %vm427, %v429, %v425
  %v431 = vmul.f32 1.0, %v430
  %v432 = vrcp.pop %v220
  %v433 = vmul.f32 %v220, %v432
  %v434 = vsub.f32 1.0, %v433
  %v435 = vmul.f32 %v432, %v434
  %v436 = vadd.f32 %v432, %v435
  %vm437 = vweird.f32 %v220
  %vm438 = vweird.f32 %v432
  %vm439 = vmor %vm437, %vm438
  %v440 = vsel %vm439, %v432, %v436
  %v441 = vand.u32 2147483647, %v220
  %vm442 = vcmp.eq.f32.partialorder %v441, 8.507059e+37
  %v443 = vand.u32 %v220, 2147483648
  %v444 = vor.u32 1.1754944e-38, %v443
  %v445 = vsel %vm442, %v444, %v440
  %v446 = vmul.f32 1.0, %v445
  %v447 = vrcp.pop %v221
  %v448 = vmul.f32 %v221, %v447
  %v449 = vsub.f32 1.0, %v448
  %v450 = vmul.f32 %v447, %v449
  %v451 = vadd.f32 %v447, %v450
  %vm452 = vweird.f32 %v221
  %vm453 = vweird.f32 %v447
  %vm454 = vmor %vm452, %vm453
  %v455 = vsel %vm454, %v447, %v451
  %v456 = vand.u32 2147483647, %v221
  %vm457 = vcmp.eq.f32.partialorder %v456, 8.507059e+37
  %v458 = vand.u32 %v221, 2147483648
  %v459 = vor.u32 1.1754944e-38, %v458
  %v460 = vsel %vm457, %v459, %v455
  %v461 = vmul.f32 1.0, %v460
  %v462 = vld [vmem:[%s3] sm:$0xff]
  %v463 = vld [vmem:[%s3 + $0x8] sm:$0xff]
  %v464 = vld [vmem:[%s3 + $0x10] sm:$0xff]
  %v465 = vld [vmem:[%s3 + $0x18] sm:$0xff]
  %v466 = vld [vmem:[%s4] sm:$0x1]
  %v468 = vperm.slane %v466, 0
  %v471 = vsel %vm44, %v236, 0
  %v474 = vsel %vm44, %v251, 0
  %v477 = vsel %vm44, %v266, 0
  %v480 = vsel %vm44, %v281, 0
  %v483 = vsel %vm44, %v296, 0
  %v486 = vsel %vm44, %v311, 0
  %v489 = vsel %vm44, %v326, 0
  %v492 = vsel %vm44, %v341, 0
  %v495 = vsel %vm44, %v356, 0
  %v498 = vsel %vm44, %v371, 0
  %v501 = vsel %vm44, %v386, 0
  %v504 = vsel %vm44, %v401, 0
  %v507 = vsel %vm44, %v416, 0
  %v510 = vsel %vm44, %v431, 0
  %v513 = vsel %vm44, %v446, 0
  %v516 = vsel %vm44, %v461, 0
  %518 = vmatpush.msra.mxu0 0.0
  %519 = vmatpush.msra.mxu0 0.0
  %520 = vmatpush.msra.mxu0 0.0
  %521 = vmatpush.msra.mxu0 0.0
  %522 = vmatpush.msra.mxu0 0.0
  %523 = vmatpush.msra.mxu0 0.0
  %524 = vmatpush.msra.mxu0 0.0
  %525 = vmatpush.msra.mxu0 0.0
  %526 = vmatpush.msra.mxu0 0.0
  %527 = vmatpush.msra.mxu0 0.0
  %528 = vmatpush.msra.mxu0 0.0
  %529 = vmatpush.msra.mxu0 0.0
  %530 = vmatpush.msra.mxu0 %v465
  %531 = vmatpush.msra.mxu0 %v464
  %532 = vmatpush.msra.mxu0 %v463
  %533 = vmatpush.msra.mxu0 %v462
  %534 = vmatmul.f32.gmra.mxu0 %v471
  %v535 = vpop.f32.mrf.mxu0
  %v536 = vadd.f32 %v468, %v535
  %537 = vmatmul.f32.gmra.mxu0 %v474
  %v538 = vpop.f32.mrf.mxu0
  %v539 = vadd.f32 %v468, %v538
  %540 = vmatmul.f32.gmra.mxu0 %v477
  %v541 = vpop.f32.mrf.mxu0
  %v542 = vadd.f32 %v468, %v541
  %543 = vmatmul.f32.gmra.mxu0 %v480
  %v544 = vpop.f32.mrf.mxu0
  %v545 = vadd.f32 %v468, %v544
  %546 = vmatmul.f32.gmra.mxu0 %v483
  %v547 = vpop.f32.mrf.mxu0
  %v548 = vadd.f32 %v468, %v547
  %549 = vmatmul.f32.gmra.mxu0 %v486
  %v550 = vpop.f32.mrf.mxu0
  %v551 = vadd.f32 %v468, %v550
  %552 = vmatmul.f32.gmra.mxu0 %v489
  %v553 = vpop.f32.mrf.mxu0
  %v554 = vadd.f32 %v468, %v553
  %555 = vmatmul.f32.gmra.mxu0 %v492
  %v556 = vpop.f32.mrf.mxu0
  %v557 = vadd.f32 %v468, %v556
  %558 = vmatmul.f32.gmra.mxu0 %v495
  %v559 = vpop.f32.mrf.mxu0
  %v560 = vadd.f32 %v468, %v559
  %561 = vmatmul.f32.gmra.mxu0 %v498
  %v562 = vpop.f32.mrf.mxu0
  %v563 = vadd.f32 %v468, %v562
  %564 = vmatmul.f32.gmra.mxu0 %v501
  %v565 = vpop.f32.mrf.mxu0
  %v566 = vadd.f32 %v468, %v565
  %567 = vmatmul.f32.gmra.mxu0 %v504
  %v568 = vpop.f32.mrf.mxu0
  %v569 = vadd.f32 %v468, %v568
  %570 = vmatmul.f32.gmra.mxu0 %v507
  %v571 = vpop.f32.mrf.mxu0
  %v572 = vadd.f32 %v468, %v571
  %573 = vmatmul.f32.gmra.mxu0 %v510
  %v574 = vpop.f32.mrf.mxu0
  %v575 = vadd.f32 %v468, %v574
  %576 = vmatmul.f32.gmra.mxu0 %v513
  %v577 = vpop.f32.mrf.mxu0
  %v578 = vadd.f32 %v468, %v577
  %579 = vmatmul.f32.gmra.mxu0 %v516
  %v580 = vpop.f32.mrf.mxu0
  %v581 = vadd.f32 %v468, %v580
  %582 = vdwg.mxu0
  %vm583 = vcmask 64512
  %584 = vst.msk [vmem:[%s5] sm:$0xff] %vm583, %v536
  %585 = vst.msk [vmem:[%s5 + $0x8] sm:$0xff] %vm583, %v539
  %586 = vst.msk [vmem:[%s5 + $0x10] sm:$0xff] %vm583, %v542
  %587 = vst.msk [vmem:[%s5 + $0x18] sm:$0xff] %vm583, %v545
  %588 = vst.msk [vmem:[%s5 + $0x20] sm:$0xff] %vm583, %v548
  %589 = vst.msk [vmem:[%s5 + $0x28] sm:$0xff] %vm583, %v551
  %590 = vst.msk [vmem:[%s5 + $0x30] sm:$0xff] %vm583, %v554
  %591 = vst.msk [vmem:[%s5 + $0x38] sm:$0xff] %vm583, %v557
  %592 = vst.msk [vmem:[%s5 + $0x40] sm:$0xff] %vm583, %v560
  %593 = vst.msk [vmem:[%s5 + $0x48] sm:$0xff] %vm583, %v563
  %594 = vst.msk [vmem:[%s5 + $0x50] sm:$0xff] %vm583, %v566
  %595 = vst.msk [vmem:[%s5 + $0x58] sm:$0xff] %vm583, %v569
  %596 = vst.msk [vmem:[%s5 + $0x60] sm:$0xff] %vm583, %v572
  %597 = vst.msk [vmem:[%s5 + $0x68] sm:$0xff] %vm583, %v575
  %598 = vst.msk [vmem:[%s5 + $0x70] sm:$0xff] %vm583, %v578
  %599 = vst.msk [vmem:[%s5 + $0x78] sm:$0xff] %vm583, %v581
  // Predicated region
  $region22: #{denoiser_forward.8} parent=0 // pred_check
    _
  $region23: #{denoiser_forward.8} parent=0 // pred_check_branch
    %601 = sbr.rel (0) target = $region25
  $region24: #{denoiser_forward.8} parent=0 // pred_region
    _
  $region25: #{denoiser_forward.8} parent=0 // pred_fallthru
    _
  // Predicated region
  $region26: #{denoiser_forward.8} parent=0 // pred_check
    _
  $region27: #{denoiser_forward.8} parent=0 // pred_check_branch
    %603 = sbr.rel (0) target = $region29
  $region28: #{denoiser_forward.8} parent=0 // pred_region
    _
  $region29: #{denoiser_forward.8} parent=0 // pred_fallthru
    _

// kernel: denoiser_forward.6
$region0: #{denoiser_forward.6}
  #allocation0 [shape = 'u32[]', space=smem, size = 0x4, offset = 0x4, fixed_abs, tag = 'smem constant byte address 0x4 - core index']
  #allocation1 [shape = 'u32[72,128]{1,0:T(1,128)}', space=vmem, size = 0x9000, scoped, tag = 'internal scratch']
  %s0 = inlined_call_operand.vmem [shape: f32[128,8], index: 0, kind: input, shape index: {}]
  %s1 = inlined_call_operand.vmem [shape: f32[8,32], index: 1, kind: input, shape index: {}]
  %s2 = inlined_call_operand.vmem [shape: f32[1,32], index: 2, kind: input, shape index: {}]
  %s3 = inlined_call_operand.vmem [shape: f32[128,32], index: 3, kind: output, shape index: {}]
  %s4 = sld [smem:[#allocation0]]
  $region22: #{denoiser_forward.6} parent=0
    _
  %s6 = ssub.s32 1, %s4
  %s7 = scalar_select 0, %s6, %s4
  // Predicated region
  $region2: #{denoiser_forward.6} parent=0 // pred_check
    _
  $region3: #{denoiser_forward.6} parent=0 // pred_check_branch
    %9 = sbr.rel (0) target = $region5
  $region4: #{denoiser_forward.6} parent=0 // pred_region
    _
  $region5: #{denoiser_forward.6} parent=0 // pred_fallthru
    _
  // Predicated region
  $region6: #{denoiser_forward.6} parent=0 // pred_check
    _
  $region7: #{denoiser_forward.6} parent=0 // pred_check_branch
    %11 = sbr.rel (0) target = $region9
  $region8: #{denoiser_forward.6} parent=0 // pred_region
    _
  $region9: #{denoiser_forward.6} parent=0 // pred_fallthru
    _
  // Predicated region
  $region10: #{denoiser_forward.6} parent=0 // pred_check
    _
  $region11: #{denoiser_forward.6} parent=0 // pred_check_branch
    %13 = sbr.rel (0) target = $region13
  $region12: #{denoiser_forward.6} parent=0 // pred_region
    _
  $region13: #{denoiser_forward.6} parent=0 // pred_fallthru
    _
  %v14 = vld [vmem:[%s0] sm:$0xff]
  %v15 = vld [vmem:[%s0 + $0x8] sm:$0xff]
  %v16 = vld [vmem:[%s0 + $0x10] sm:$0xff]
  %v17 = vld [vmem:[%s0 + $0x18] sm:$0xff]
  %v18 = vld [vmem:[%s0 + $0x20] sm:$0xff]
  %v19 = vld [vmem:[%s0 + $0x28] sm:$0xff]
  %v20 = vld [vmem:[%s0 + $0x30] sm:$0xff]
  %v21 = vld [vmem:[%s0 + $0x38] sm:$0xff]
  %v22 = vld [vmem:[%s0 + $0x40] sm:$0xff]
  %v23 = vld [vmem:[%s0 + $0x48] sm:$0xff]
  %v24 = vld [vmem:[%s0 + $0x50] sm:$0xff]
  %v25 = vld [vmem:[%s0 + $0x58] sm:$0xff]
  %v26 = vld [vmem:[%s0 + $0x60] sm:$0xff]
  %v27 = vld [vmem:[%s0 + $0x68] sm:$0xff]
  %v28 = vld [vmem:[%s0 + $0x70] sm:$0xff]
  %v29 = vld [vmem:[%s0 + $0x78] sm:$0xff]
  %v30 = vld [vmem:[%s1] sm:$0xff]
  %v31 = vld [vmem:[%s2] sm:$0x1]
  %v33 = vperm.slane %v31, 0
  %vm35 = vcmask 64512
  %v37 = vsel %vm35, %v14, 0
  %v40 = vsel %vm35, %v15, 0
  %v43 = vsel %vm35, %v16, 0
  %v46 = vsel %vm35, %v17, 0
  %v49 = vsel %vm35, %v18, 0
  %v52 = vsel %vm35, %v19, 0
  %v55 = vsel %vm35, %v20, 0
  %v58 = vsel %vm35, %v21, 0
  %v61 = vsel %vm35, %v22, 0
  %v64 = vsel %vm35, %v23, 0
  %v67 = vsel %vm35, %v24, 0
  %v70 = vsel %vm35, %v25, 0
  %v73 = vsel %vm35, %v26, 0
  %v76 = vsel %vm35, %v27, 0
  %v79 = vsel %vm35, %v28, 0
  %v82 = vsel %vm35, %v29, 0
  %84 = vmatpush.msra.mxu0 0.0
  %85 = vmatpush.msra.mxu0 0.0
  %86 = vmatpush.msra.mxu0 0.0
  %87 = vmatpush.msra.mxu0 0.0
  %88 = vmatpush.msra.mxu0 0.0
  %89 = vmatpush.msra.mxu0 0.0
  %90 = vmatpush.msra.mxu0 0.0
  %91 = vmatpush.msra.mxu0 0.0
  %92 = vmatpush.msra.mxu0 0.0
  %93 = vmatpush.msra.mxu0 0.0
  %94 = vmatpush.msra.mxu0 0.0
  %95 = vmatpush.msra.mxu0 0.0
  %96 = vmatpush.msra.mxu0 0.0
  %97 = vmatpush.msra.mxu0 0.0
  %98 = vmatpush.msra.mxu0 0.0
  %99 = vmatpush.msra.mxu0 %v30
  %100 = vmatmul.f32.gmra.mxu0 %v37
  %v101 = vpop.f32.mrf.mxu0
  %v102 = vadd.f32 %v33, %v101
  %103 = vmatmul.f32.gmra.mxu0 %v40
  %v104 = vpop.f32.mrf.mxu0
  %v105 = vadd.f32 %v33, %v104
  %106 = vmatmul.f32.gmra.mxu0 %v43
  %v107 = vpop.f32.mrf.mxu0
  %v108 = vadd.f32 %v33, %v107
  %109 = vmatmul.f32.gmra.mxu0 %v46
  %v110 = vpop.f32.mrf.mxu0
  %v111 = vadd.f32 %v33, %v110
  %112 = vmatmul.f32.gmra.mxu0 %v49
  %v113 = vpop.f32.mrf.mxu0
  %v114 = vadd.f32 %v33, %v113
  %115 = vmatmul.f32.gmra.mxu0 %v52
  %v116 = vpop.f32.mrf.mxu0
  %v117 = vadd.f32 %v33, %v116
  %118 = vmatmul.f32.gmra.mxu0 %v55
  %v119 = vpop.f32.mrf.mxu0
  %v120 = vadd.f32 %v33, %v119
  %121 = vmatmul.f32.gmra.mxu0 %v58
  %v122 = vpop.f32.mrf.mxu0
  %v123 = vadd.f32 %v33, %v122
  %124 = vmatmul.f32.gmra.mxu0 %v61
  %v125 = vpop.f32.mrf.mxu0
  %v126 = vadd.f32 %v33, %v125
  %127 = vmatmul.f32.gmra.mxu0 %v64
  %v128 = vpop.f32.mrf.mxu0
  %v129 = vadd.f32 %v33, %v128
  %130 = vmatmul.f32.gmra.mxu0 %v67
  %v131 = vpop.f32.mrf.mxu0
  %v132 = vadd.f32 %v33, %v131
  %133 = vmatmul.f32.gmra.mxu0 %v70
  %v134 = vpop.f32.mrf.mxu0
  %v135 = vadd.f32 %v33, %v134
  %136 = vmatmul.f32.gmra.mxu0 %v73
  %v137 = vpop.f32.mrf.mxu0
  %v138 = vadd.f32 %v33, %v137
  %139 = vmatmul.f32.gmra.mxu0 %v76
  %v140 = vpop.f32.mrf.mxu0
  %v141 = vadd.f32 %v33, %v140
  %142 = vmatmul.f32.gmra.mxu0 %v79
  %v143 = vpop.f32.mrf.mxu0
  %v144 = vadd.f32 %v33, %v143
  %145 = vmatmul.f32.gmra.mxu0 %v82
  %v146 = vpop.f32.mrf.mxu0
  %v147 = vadd.f32 %v33, %v146
  %148 = vdwg.mxu0
  %vm149 = vcmask 261120
  %150 = vst.msk [vmem:[%s3] sm:$0xff] %vm149, %v102
  %151 = vst.msk [vmem:[%s3 + $0x8] sm:$0xff] %vm149, %v105
  %152 = vst.msk [vmem:[%s3 + $0x10] sm:$0xff] %vm149, %v108
  %153 = vst.msk [vmem:[%s3 + $0x18] sm:$0xff] %vm149, %v111
  %154 = vst.msk [vmem:[%s3 + $0x20] sm:$0xff] %vm149, %v114
  %155 = vst.msk [vmem:[%s3 + $0x28] sm:$0xff] %vm149, %v117
  %156 = vst.msk [vmem:[%s3 + $0x30] sm:$0xff] %vm149, %v120
  %157 = vst.msk [vmem:[%s3 + $0x38] sm:$0xff] %vm149, %v123
  %158 = vst.msk [vmem:[%s3 + $0x40] sm:$0xff] %vm149, %v126
  %159 = vst.msk [vmem:[%s3 + $0x48] sm:$0xff] %vm149, %v129
  %160 = vst.msk [vmem:[%s3 + $0x50] sm:$0xff] %vm149, %v132
  %161 = vst.msk [vmem:[%s3 + $0x58] sm:$0xff] %vm149, %v135
  %162 = vst.msk [vmem:[%s3 + $0x60] sm:$0xff] %vm149, %v138
  %163 = vst.msk [vmem:[%s3 + $0x68] sm:$0xff] %vm149, %v141
  %164 = vst.msk [vmem:[%s3 + $0x70] sm:$0xff] %vm149, %v144
  %165 = vst.msk [vmem:[%s3 + $0x78] sm:$0xff] %vm149, %v147
  // Predicated region
  $region14: #{denoiser_forward.6} parent=0 // pred_check
    _
  $region15: #{denoiser_forward.6} parent=0 // pred_check_branch
    %167 = sbr.rel (0) target = $region17
  $region16: #{denoiser_forward.6} parent=0 // pred_region
    _
  $region17: #{denoiser_forward.6} parent=0 // pred_fallthru
    _
  // Predicated region
  $region18: #{denoiser_forward.6} parent=0 // pred_check
    _
  $region19: #{denoiser_forward.6} parent=0 // pred_check_branch
    %169 = sbr.rel (0) target = $region21
  $region20: #{denoiser_forward.6} parent=0 // pred_region
    _
  $region21: #{denoiser_forward.6} parent=0 // pred_fallthru
    _

// kernel: denoiser_forward.7
$region0: #{denoiser_forward.7}
  #allocation0 [shape = 'u32[]', space=smem, size = 0x4, offset = 0x4, fixed_abs, tag = 'smem constant byte address 0x4 - core index']
  #allocation1 [shape = 'u32[72,128]{1,0:T(1,128)}', space=vmem, size = 0x9000, scoped, tag = 'internal scratch']
  #allocation2 [shape = 'f32[1,2]{1,0:T(1,128)}', space=vmem, size = 0x200, scoped, tag = 'scratch operand']
  %s0 = inlined_call_operand.vmem [shape: f32[4,32,32], index: 0, kind: input, shape index: {}]
  %s1 = inlined_call_operand.vmem [shape: f32[1,32], index: 1, kind: input, shape index: {}]
  %s2 = inlined_call_operand.vmem [shape: f32[1,32], index: 2, kind: input, shape index: {}]
  %s3 = inlined_call_operand.vmem [shape: f32[4,32,32], index: 3, kind: output, shape index: {}]
  %s4 = sld [smem:[#allocation0]]
  $region49: #{denoiser_forward.7} parent=0
    _
  %s6 = ssub.s32 1, %s4
  %s7 = scalar_select 0, %s6, %s4
  loop: start=0, step=1, limit=6
  $region2: #{denoiser_forward.7} parent=0 // loop_pre_header
    _
  $region3: #{denoiser_forward.7} parent=0 // loop_header
    %s9 = sphi 0, %s13
    %p10 = scmp.ge.s32.totalorder %s9, 6
    %s16 = sphi 0, %s28
    %s17 = sphi 0, %s24
    %s18 = sphi 0, %s16
    %s19 = sphi 0, %s17
    %s20 = sphi 0, %s18
    %s21 = sphi 0, %s19
    %s33 = sphi 0, %s35
    %s36 = sphi 0, %s33
    %s37 = sphi 0, %s36
    %s53 = sphi 0, %s37
    %s57 = sphi 0, %s57
    %s59 = sphi 0, %s57
    %s60 = sphi 0, %s59
    %s74 = sphi 0, %s60
    %s78 = sphi 0, %s78
    %s80 = sphi 0, %s78
    %s81 = sphi 0, %s80
    %s95 = sphi 0, %s81
    %s103 = sphi 0, %s105
    %s106 = sphi 0, %s103
    %s107 = sphi 0, %s106
    %s123 = sphi 0, %s107
  $region4: #{denoiser_forward.7} parent=0 // loop_header_branch
    %12 = sbr.rel (%p10) target = $region8
  $region5: #{denoiser_forward.7} parent=0 // loop_body
    %s14 = ssub.s32 %s9, 1
    %s15 = ssub.s32 %s9, 2
    %s22 = sadd.s32 1, %s17
    %p23 = scmp.ge.s32.totalorder %s22, 1
    %s24 = scalar_select %p23, 0, %s22
    %s25 = sadd.s32 1, %s16
    %s26 = scalar_select %p23, %s25, %s16
    %p27 = scmp.ge.s32.totalorder %s26, 4
    %s28 = scalar_select %p27, 0, %s26
    %s29 = ssub.s32 %s16, %s28
    %s30 = ssub.s32 %s17, %s24
    %s31 = sor.u32 %s29, %s30
    %p32 = scmp.eq.s32.totalorder %s31, 0
    %s34 = sadd.s32 %s33, 1
    %s35 = scalar_select %p32, %s33, %s34
    %p38 = pneg %p32
    %p39 = scmp.eq.s32.totalorder %s9, 3
    %p40 = por %p38, %p39
    %p41 = scmp.ne.s32.totalorder %s33, %s36
    %p42 = scmp.eq.s32.totalorder %s9, 0
    %p43 = por %p41, %p42
    %p44 = scmp.ne.s32.totalorder %s33, %s36
    %p45 = scmp.eq.s32.totalorder %s14, 3
    %p46 = por %p44, %p45
    %p47 = scmp.ne.s32.totalorder %s36, %s37
    %p48 = scmp.eq.s32.totalorder %s14, 0
    %p49 = por %p47, %p48
    %p50 = scmp.ne.s32.totalorder %s36, %s37
    %p51 = scmp.eq.s32.totalorder %s15, 3
    %p52 = por %p50, %p51
    %p54 = scmp.ne.s32.totalorder %s37, %s53
    %p55 = scmp.eq.s32.totalorder %s15, 0
    %p56 = por %p54, %p55
    %s58 = sadd.s32 %s57, 1
    %p61 = scmp.eq.s32.totalorder %s9, 3
    %p62 = scmp.ne.s32.totalorder %s57, %s59
    %p63 = scmp.eq.s32.totalorder %s9, 0
    %p64 = por %p62, %p63
    %p65 = scmp.ne.s32.totalorder %s57, %s59
    %p66 = scmp.eq.s32.totalorder %s14, 3
    %p67 = por %p65, %p66
    %p68 = scmp.ne.s32.totalorder %s59, %s60
    %p69 = scmp.eq.s32.totalorder %s14, 0
    %p70 = por %p68, %p69
    %p71 = scmp.ne.s32.totalorder %s59, %s60
    %p72 = scmp.eq.s32.totalorder %s15, 3
    %p73 = por %p71, %p72
    %p75 = scmp.ne.s32.totalorder %s60, %s74
    %p76 = scmp.eq.s32.totalorder %s15, 0
    %p77 = por %p75, %p76
    %s79 = sadd.s32 %s78, 1
    %p82 = scmp.eq.s32.totalorder %s9, 3
    %p83 = scmp.ne.s32.totalorder %s78, %s80
    %p84 = scmp.eq.s32.totalorder %s9, 0
    %p85 = por %p83, %p84
    %p86 = scmp.ne.s32.totalorder %s78, %s80
    %p87 = scmp.eq.s32.totalorder %s14, 3
    %p88 = por %p86, %p87
    %p89 = scmp.ne.s32.totalorder %s80, %s81
    %p90 = scmp.eq.s32.totalorder %s14, 0
    %p91 = por %p89, %p90
    %p92 = scmp.ne.s32.totalorder %s80, %s81
    %p93 = scmp.eq.s32.totalorder %s15, 3
    %p94 = por %p92, %p93
    %p96 = scmp.ne.s32.totalorder %s81, %s95
    %p97 = scmp.eq.s32.totalorder %s15, 0
    %p98 = por %p96, %p97
    %s99 = ssub.s32 %s16, %s28
    %s100 = ssub.s32 %s17, %s24
    %s101 = sor.u32 %s99, %s100
    %p102 = scmp.eq.s32.totalorder %s101, 0
    %s104 = sadd.s32 %s103, 1
    %s105 = scalar_select %p102, %s103, %s104
    %p108 = pneg %p102
    %p109 = scmp.eq.s32.totalorder %s9, 3
    %p110 = por %p108, %p109
    %p111 = scmp.ne.s32.totalorder %s103, %s106
    %p112 = scmp.eq.s32.totalorder %s9, 0
    %p113 = por %p111, %p112
    %p114 = scmp.ne.s32.totalorder %s103, %s106
    %p115 = scmp.eq.s32.totalorder %s14, 3
    %p116 = por %p114, %p115
    %p117 = scmp.ne.s32.totalorder %s106, %s107
    %p118 = scmp.eq.s32.totalorder %s14, 0
    %p119 = por %p117, %p118
    %p120 = scmp.ne.s32.totalorder %s106, %s107
    %p121 = scmp.eq.s32.totalorder %s15, 3
    %p122 = por %p120, %p121
    %p124 = scmp.ne.s32.totalorder %s107, %s123
    %p125 = scmp.eq.s32.totalorder %s15, 0
    %p126 = por %p124, %p125
    %p127 = scmp.le.s32.totalorder 1, %s9
    %p128 = scmp.lt.s32.totalorder %s9, 5
    %p129 = pnand %p127, %p128
    %p130 = pneg %p129
    // Predicated region
    $region9: #{denoiser_forward.7} parent=5 // pred_check
      _
    $region10: #{denoiser_forward.7} parent=5 // pred_check_branch
      %132 = sbr.rel (%p129) target = $region12
    $region11: #{denoiser_forward.7} parent=5 // pred_region
      %s133 = ssub.s32 %s9, 1
      // Predicated region
      $region13: #{denoiser_forward.7} parent=11 // pred_check
        %p134 = pneg %p70
      $region14: #{denoiser_forward.7} parent=11 // pred_check_branch
        %136 = sbr.rel (%p134) target = $region16
      $region15: #{denoiser_forward.7} parent=11 // pred_region
        _
      $region16: #{denoiser_forward.7} parent=11 // pred_fallthru
        _
      // Predicated region
      $region17: #{denoiser_forward.7} parent=11 // pred_check
        %p137 = pneg %p91
      $region18: #{denoiser_forward.7} parent=11 // pred_check_branch
        %139 = sbr.rel (%p137) target = $region20
      $region19: #{denoiser_forward.7} parent=11 // pred_region
        _
      $region20: #{denoiser_forward.7} parent=11 // pred_fallthru
        _
    $region12: #{denoiser_forward.7} parent=5 // pred_fallthru
      _
    %p140 = scmp.lt.s32.totalorder %s9, 4
    // Predicated region
    $region21: #{denoiser_forward.7} parent=5 // pred_check
      %p141 = pneg %p140
    $region22: #{denoiser_forward.7} parent=5 // pred_check_branch
      %143 = sbr.rel (%p141) target = $region24
    $region23: #{denoiser_forward.7} parent=5 // pred_region
      // Predicated region
      $region25: #{denoiser_forward.7} parent=23 // pred_check
        %p144 = pneg %p43
      $region26: #{denoiser_forward.7} parent=23 // pred_check_branch
        %146 = sbr.rel (%p144) target = $region28
      $region27: #{denoiser_forward.7} parent=23 // pred_region
        %s147 = smul.u32 4, %s17
        %p148 = scmp.lt.s32.totalorder %s16, 3
        %s149 = scalar_select %p148, %s16, 3
        %p150 = scmp.lt.s32.totalorder %s147, 3
        %s151 = scalar_select %p150, %s147, 3
        %s152 = smul.addr %s149, 4
        %s153 = sadd.s32 %s151, %s152
        %s154 = smul.addr %s153, 8
        %s155 = scalar_lea.vmem %s0, %s154
        %s156 = smul.u32 4, %s17
      $region28: #{denoiser_forward.7} parent=23 // pred_fallthru
        _
    $region24: #{denoiser_forward.7} parent=5 // pred_fallthru
      _
    %p157 = scmp.le.s32.totalorder 1, %s9
    %p158 = scmp.lt.s32.totalorder %s9, 5
    %p159 = pnand %p157, %p158
    %p160 = pneg %p159
    // Predicated region
    $region29: #{denoiser_forward.7} parent=5 // pred_check
      _
    $region30: #{denoiser_forward.7} parent=5 // pred_check_branch
      %162 = sbr.rel (%p159) target = $region32
    $region31: #{denoiser_forward.7} parent=5 // pred_region
      %s163 = ssub.s32 %s9, 1
      %s164 = smul.u32 4, %s19
      %p165 = scmp.lt.s32.totalorder %s18, 3
      %s166 = scalar_select %p165, %s18, 3
      %p167 = scmp.lt.s32.totalorder %s164, 3
      %s168 = scalar_select %p167, %s164, 3
      %s169 = smul.addr %s166, 4
      %s170 = sadd.s32 %s168, %s169
      %s171 = smul.addr %s170, 8
      %s172 = scalar_lea.vmem %s0, %s171
      %p173 = pneg %p49
      %p174 = pneg %p46
      %p175 = pneg %p70
      %p176 = pneg %p67
      %p177 = pneg %p91
      %p178 = pneg %p88
      %p179 = pneg %p119
      %p180 = pneg %p116
      %s181 = smul.u32 4, %s19
      %p182 = scmp.lt.s32.totalorder %s18, 3
      %s183 = scalar_select %p182, %s18, 3
      %p184 = scmp.lt.s32.totalorder %s181, 3
      %s185 = scalar_select %p184, %s181, 3
      %s186 = smul.addr %s183, 4
      %s187 = sadd.s32 %s185, %s186
      %s188 = smul.addr %s187, 8
      %s189 = scalar_lea.vmem %s3, %s188
      %s190 = smul.u32 4, %s19
      %p191 = scmp.lt.s32.totalorder %s18, 3
      %s192 = scalar_select %p191, %s18, 3
      %p193 = scmp.lt.s32.totalorder %s190, 3
      %s194 = scalar_select %p193, %s190, 3
      %s195 = smul.addr %s192, 4
      %s196 = sadd.s32 %s194, %s195
      %s197 = smul.addr %s196, 8
      %s198 = scalar_lea.vmem %s0, %s197
      %s199 = smul.u32 4, %s19
      %s200 = smul.u32 4, %s19
      %p201 = scmp.lt.s32.totalorder %s18, 3
      %s202 = scalar_select %p201, %s18, 3
      %p203 = scmp.lt.s32.totalorder %s200, 3
      %s204 = scalar_select %p203, %s200, 3
      %s205 = smul.addr %s202, 4
      %s206 = sadd.s32 %s204, %s205
      %s207 = smul.addr %s206, 8
      %s208 = scalar_lea.vmem %s3, %s207
      %s209 = smul.u32 4, %s19
      %p210 = scmp.eq.s32.totalorder %s19, 0
      // Predicated region
      $region33: #{denoiser_forward.7} parent=31 // pred_check
        %p211 = pneg %p210
      $region34: #{denoiser_forward.7} parent=31 // pred_check_branch
        %213 = sbr.rel (%p211) target = $region36
      $region35: #{denoiser_forward.7} parent=31 // pred_region
        %vm214 = vcmask 8192
        %215 = vst.msk [vmem:[#allocation2] sm:$0x1] %vm214, 0.0
      $region36: #{denoiser_forward.7} parent=31 // pred_fallthru
        _
      %v216 = vld [vmem:[%s198] sm:$0xff]
      %v217 = vld [vmem:[%s198 + $0x8] sm:$0xff]
      %v218 = vld [vmem:[%s198 + $0x10] sm:$0xff]
      %v219 = vld [vmem:[%s198 + $0x18] sm:$0xff]
      %v220 = vlaneseq
      %v221 = vshrl.u32 %v220, 7
      %v222 = vadd.s32 %v221, 8
      %v223 = vadd.s32 %v221, 16
      %v224 = vadd.s32 %v221, 24
      %s225 = smul.u32 %s19, 32
      %v226 = vstv %s225
      %v227 = vadd.s32 %v226, %v221
      %v228 = vadd.s32 %v226, %v222
      %v229 = vadd.s32 %v226, %v223
      %v230 = vadd.s32 %v226, %v224
      %vm231 = vcmp.lt.s32.totalorder %v227, 32
      %vm232 = vcmp.lt.s32.totalorder %v228, 32
      %vm233 = vcmp.lt.s32.totalorder %v229, 32
      %vm234 = vcmp.lt.s32.totalorder %v230, 32
      %v235 = vsel %vm231, 1, 0
      %v236 = vsel %vm232, 1, 0
      %v237 = vsel %vm233, 1, 0
      %v238 = vsel %vm234, 1, 0
      %vm239 = vcmp.eq.s32.totalorder %v235, 1
      %vm240 = vcmp.eq.s32.totalorder %v236, 1
      %vm241 = vcmp.eq.s32.totalorder %v237, 1
      %vm242 = vcmp.eq.s32.totalorder %v238, 1
      %v243 = vsel %vm239, %v216, 0.0
      %v244 = vsel %vm240, %v217, 0.0
      %v245 = vsel %vm241, %v218, 0.0
      %v246 = vsel %vm242, %v219, 0.0
      %vm247 = vcmask 261120
      %v248 = vsel %vm247, %v243, 0.0
      %249 = vadd.xlane.f32.xlu0 %v248
      %v250 = vpop.xlane.xlu0 %249
      %v251 = vsel %vm247, %v244, 0.0
      %252 = vadd.xlane.f32.xlu0 %v251
      %v253 = vpop.xlane.xlu0 %252
      %v254 = vsel %vm247, %v245, 0.0
      %255 = vadd.xlane.f32.xlu0 %v254
      %v256 = vpop.xlane.xlu0 %255
      %v257 = vsel %vm247, %v246, 0.0
      %258 = vadd.xlane.f32.xlu0 %v257
      %v259 = vpop.xlane.xlu0 %258
      %v260 = vmul.f32 %v243, %v243
      %v261 = vmul.f32 %v244, %v244
      %v262 = vmul.f32 %v245, %v245
      %v263 = vmul.f32 %v246, %v246
      %v264 = vsel %vm247, %v260, 0.0
      %265 = vadd.xlane.f32.xlu0 %v264
      %v266 = vpop.xlane.xlu0 %265
      %v267 = vsel %vm247, %v261, 0.0
      %268 = vadd.xlane.f32.xlu0 %v267
      %v269 = vpop.xlane.xlu0 %268
      %v270 = vsel %vm247, %v262, 0.0
      %271 = vadd.xlane.f32.xlu0 %v270
      %v272 = vpop.xlane.xlu0 %271
      %v273 = vsel %vm247, %v263, 0.0
      %274 = vadd.xlane.f32.xlu0 %v273
      %v275 = vpop.xlane.xlu0 %274
      %vm276 = vcmask 7168
      %v277 = vsel %vm276, %v250, %v266
      %v278 = vsel %vm276, %v253, %v269
      %v279 = vsel %vm276, %v256, %v272
      %v280 = vsel %vm276, %v259, %v275
      %v281 = vlaneseq
      %v282 = vand.u32 %v281, 127
      %vm283 = vcmp.le.s32.totalorder %v282, %v221
      %vm284 = vcmp.le.s32.totalorder %v282, %v222
      %vm285 = vcmp.le.s32.totalorder %v282, %v223
      %vm286 = vcmp.le.s32.totalorder %v282, %v224
      %v287 = vsel %vm283, 1, 0
      %v288 = vsel %vm284, 1, 0
      %v289 = vsel %vm285, 1, 0
      %v290 = vsel %vm286, 1, 0
      %v291 = vcvt.s32.f32 %v287
      %v292 = vcvt.s32.f32 %v288
      %v293 = vcvt.s32.f32 %v289
      %v294 = vcvt.s32.f32 %v290
      %v295 = vld [vmem:[#allocation2] sm:$0x1]
      %v297 = vperm.slane %v295, 0
      %v300 = vsel %vm247, %v291, 0
      %v303 = vsel %vm247, %v292, 0
      %v306 = vsel %vm247, %v293, 0
      %v309 = vsel %vm247, %v294, 0
      %311 = vmatpush.msra.mxu0 0.0
      %312 = vmatpush.msra.mxu0 0.0
      %313 = vmatpush.msra.mxu0 0.0
      %314 = vmatpush.msra.mxu0 0.0
      %315 = vmatpush.msra.mxu0 0.0
      %316 = vmatpush.msra.mxu0 0.0
      %317 = vmatpush.msra.mxu0 0.0
      %318 = vmatpush.msra.mxu0 0.0
      %319 = vmatpush.msra.mxu0 0.0
      %320 = vmatpush.msra.mxu0 0.0
      %321 = vmatpush.msra.mxu0 0.0
      %322 = vmatpush.msra.mxu0 0.0
      %323 = vmatpush.msra.mxu0 %v280
      %324 = vmatpush.msra.mxu0 %v279
      %325 = vmatpush.msra.mxu0 %v278
      %326 = vmatpush.msra.mxu0 %v277
      %327 = vmatmul.f32.gmra.mxu0 %v300
      %v328 = vpop.f32.mrf.mxu0
      %v329 = vadd.f32 %v297, %v328
      %330 = vmatmul.f32.gmra.mxu0 %v303
      %v331 = vpop.f32.mrf.mxu0
      %v332 = vadd.f32 %v297, %v331
      %333 = vmatmul.f32.gmra.mxu0 %v306
      %v334 = vpop.f32.mrf.mxu0
      %v335 = vadd.f32 %v297, %v334
      %336 = vmatmul.f32.gmra.mxu0 %v309
      %v337 = vpop.f32.mrf.mxu0
      %v338 = vadd.f32 %v297, %v337
      %339 = vdwg.mxu0
      %vm340 = vcmask 15360
      %v341 = vsel %vm340, %v277, 0.0
      %v342 = vsel %vm340, %v278, 0.0
      %v343 = vadd.f32 %v341, %v342
      %v344 = vsel %vm340, %v279, 0.0
      %v345 = vadd.f32 %v343, %v344
      %v346 = vsel %vm340, %v280, 0.0
      %v347 = vadd.f32 %v345, %v346
      %v348 = vrot.slane %v347, 4
      %v349 = vadd.f32 %v347, %v348
      %v350 = vrot.slane %v349, 2
      %v351 = vadd.f32 %v349, %v350
      %v352 = vrot.slane %v351, 1
      %v353 = vadd.f32 %v351, %v352
      %v354 = vadd.f32 %v295, %v353
      %vm355 = vcmask 8192
      %356 = vst.msk [vmem:[#allocation2] sm:$0x1] %vm355, %v354
      %v357 = vadd.s32 %v227, 1
      %v358 = vadd.s32 %v228, 1
      %v359 = vadd.s32 %v229, 1
      %v360 = vadd.s32 %v230, 1
      %v361 = vcvt.s32.f32 %v357
      %v362 = vcvt.s32.f32 %v358
      %v363 = vcvt.s32.f32 %v359
      %v364 = vcvt.s32.f32 %v360
      %v365 = vmul.f32 %v361, 32.0
      %v366 = vmul.f32 %v362, 32.0
      %v367 = vmul.f32 %v363, 32.0
      %v368 = vmul.f32 %v364, 32.0
      %v369 = vrcp.pop %v365
      %v370 = vmul.f32 %v365, %v369
      %v371 = vsub.f32 1.0, %v370
      %v372 = vmul.f32 %v369, %v371
      %v373 = vadd.f32 %v369, %v372
      %vm374 = vweird.f32 %v365
      %vm375 = vweird.f32 %v369
      %vm376 = vmor %vm374, %vm375
      %v377 = vsel %vm376, %v369, %v373
      %v378 = vand.u32 2147483647, %v365
      %vm379 = vcmp.eq.f32.partialorder %v378, 8.507059e+37
      %v380 = vand.u32 %v365, 2147483648
      %v381 = vor.u32 1.1754944e-38, %v380
      %v382 = vsel %vm379, %v381, %v377
      %v383 = vmul.f32 %v329, %v382
      %v384 = vrcp.pop %v366
      %v385 = vmul.f32 %v366, %v384
      %v386 = vsub.f32 1.0, %v385
      %v387 = vmul.f32 %v384, %v386
      %v388 = vadd.f32 %v384, %v387
      %vm389 = vweird.f32 %v366
      %vm390 = vweird.f32 %v384
      %vm391 = vmor %vm389, %vm390
      %v392 = vsel %vm391, %v384, %v388
      %v393 = vand.u32 2147483647, %v366
      %vm394 = vcmp.eq.f32.partialorder %v393, 8.507059e+37
      %v395 = vand.u32 %v366, 2147483648
      %v396 = vor.u32 1.1754944e-38, %v395
      %v397 = vsel %vm394, %v396, %v392
      %v398 = vmul.f32 %v332, %v397
      %v399 = vrcp.pop %v367
      %v400 = vmul.f32 %v367, %v399
      %v401 = vsub.f32 1.0, %v400
      %v402 = vmul.f32 %v399, %v401
      %v403 = vadd.f32 %v399, %v402
      %vm404 = vweird.f32 %v367
      %vm405 = vweird.f32 %v399
      %vm406 = vmor %vm404, %vm405
      %v407 = vsel %vm406, %v399, %v403
      %v408 = vand.u32 2147483647, %v367
      %vm409 = vcmp.eq.f32.partialorder %v408, 8.507059e+37
      %v410 = vand.u32 %v367, 2147483648
      %v411 = vor.u32 1.1754944e-38, %v410
      %v412 = vsel %vm409, %v411, %v407
      %v413 = vmul.f32 %v335, %v412
      %v414 = vrcp.pop %v368
      %v415 = vmul.f32 %v368, %v414
      %v416 = vsub.f32 1.0, %v415
      %v417 = vmul.f32 %v414, %v416
      %v418 = vadd.f32 %v414, %v417
      %vm419 = vweird.f32 %v368
      %vm420 = vweird.f32 %v414
      %vm421 = vmor %vm419, %vm420
      %v422 = vsel %vm421, %v414, %v418
      %v423 = vand.u32 2147483647, %v368
      %vm424 = vcmp.eq.f32.partialorder %v423, 8.507059e+37
      %v425 = vand.u32 %v368, 2147483648
      %v426 = vor.u32 1.1754944e-38, %v425
      %v427 = vsel %vm424, %v426, %v422
      %v428 = vmul.f32 %v338, %v427
      %v429 = vmul.f32 %v383, %v383
      %v430 = vmul.f32 %v398, %v398
      %v431 = vmul.f32 %v413, %v413
      %v432 = vmul.f32 %v428, %v428
      %437 = vrot.lane.b32.xlu0 %v429, 1
      %v438 = vpop.permute.xlu0 %437
      %439 = vrot.lane.b32.xlu0 %v430, 1
      %v440 = vpop.permute.xlu0 %439
      %441 = vrot.lane.b32.xlu0 %v431, 1
      %v442 = vpop.permute.xlu0 %441
      %443 = vrot.lane.b32.xlu0 %v432, 1
      %v444 = vpop.permute.xlu0 %443
      %v449 = vsub.f32 %v383, %v438
      %v450 = vsub.f32 %v398, %v440
      %v451 = vsub.f32 %v413, %v442
      %v452 = vsub.f32 %v428, %v444
      %v453 = vmax.f32 %v449, 0.0
      %v454 = vmax.f32 %v450, 0.0
      %v455 = vmax.f32 %v451, 0.0
      %v456 = vmax.f32 %v452, 0.0
      %458 = vset.pattern.permute.xlu0 0
      %459 = vperm.xlu0 %458, %v383
      %v460 = vpop.permute.xlu0 %459
      %463 = vset.pattern.permute.xlu0 0
      %464 = vperm.xlu0 %463, %v398
      %v465 = vpop.permute.xlu0 %464
      %468 = vset.pattern.permute.xlu0 0
      %469 = vperm.xlu0 %468, %v413
      %v470 = vpop.permute.xlu0 %469
      %473 = vset.pattern.permute.xlu0 0
      %474 = vperm.xlu0 %473, %v428
      %v475 = vpop.permute.xlu0 %474
      %v477 = vsub.f32 %v243, %v460
      %v478 = vsub.f32 %v244, %v465
      %v479 = vsub.f32 %v245, %v470
      %v480 = vsub.f32 %v246, %v475
      %v481 = vrsqrt.pop %v453
      %v482 = vmul.f32 %v481, %v453
      %v483 = vmul.f32 %v482, %v481
      %v484 = vmul.f32 0.5, %v483
      %v485 = vsub.f32 1.5, %v484
      %v486 = vmul.f32 %v481, %v485
      %v487 = vmul.f32 %v453, %v486
      %vm488 = vcmp.eq.f32.partialorder %v453, inf
      %v489 = vsel %vm488, %v453, %v487
      %vm490 = vcmp.eq.f32.partialorder %v453, 0.0
      %v491 = vand.u32 %v453, 2147483648
      %v492 = vsel %vm490, %v491, %v489
      %v493 = vrsqrt.pop %v454
      %v494 = vmul.f32 %v493, %v454
      %v495 = vmul.f32 %v494, %v493
      %v496 = vmul.f32 0.5, %v495
      %v497 = vsub.f32 1.5, %v496
      %v498 = vmul.f32 %v493, %v497
      %v499 = vmul.f32 %v454, %v498
      %vm500 = vcmp.eq.f32.partialorder %v454, inf
      %v501 = vsel %vm500, %v454, %v499
      %vm502 = vcmp.eq.f32.partialorder %v454, 0.0
      %v503 = vand.u32 %v454, 2147483648
      %v504 = vsel %vm502, %v503, %v501
      %v505 = vrsqrt.pop %v455
      %v506 = vmul.f32 %v505, %v455
      %v507 = vmul.f32 %v506, %v505
      %v508 = vmul.f32 0.5, %v507
      %v509 = vsub.f32 1.5, %v508
      %v510 = vmul.f32 %v505, %v509
      %v511 = vmul.f32 %v455, %v510
      %vm512 = vcmp.eq.f32.partialorder %v455, inf
      %v513 = vsel %vm512, %v455, %v511
      %vm514 = vcmp.eq.f32.partialorder %v455, 0.0
      %v515 = vand.u32 %v455, 2147483648
      %v516 = vsel %vm514, %v515, %v513
      %v517 = vrsqrt.pop %v456
      %v518 = vmul.f32 %v517, %v456
      %v519 = vmul.f32 %v518, %v517
      %v520 = vmul.f32 0.5, %v519
      %v521 = vsub.f32 1.5, %v520
      %v522 = vmul.f32 %v517, %v521
      %v523 = vmul.f32 %v456, %v522
      %vm524 = vcmp.eq.f32.partialorder %v456, inf
      %v525 = vsel %vm524, %v456, %v523
      %vm526 = vcmp.eq.f32.partialorder %v456, 0.0
      %v527 = vand.u32 %v456, 2147483648
      %v528 = vsel %vm526, %v527, %v525
      %v529 = vadd.f32 %v492, 1e-12
      %v530 = vadd.f32 %v504, 1e-12
      %v531 = vadd.f32 %v516, 1e-12
      %v532 = vadd.f32 %v528, 1e-12
      %534 = vset.pattern.permute.xlu0 1
      %535 = vperm.xlu0 %534, %v529
      %v536 = vpop.permute.xlu0 %535
      %539 = vset.pattern.permute.xlu0 1
      %540 = vperm.xlu0 %539, %v530
      %v541 = vpop.permute.xlu0 %540
      %544 = vset.pattern.permute.xlu0 1
      %545 = vperm.xlu0 %544, %v531
      %v546 = vpop.permute.xlu0 %545
      %549 = vset.pattern.permute.xlu0 1
      %550 = vperm.xlu0 %549, %v532
      %v551 = vpop.permute.xlu0 %550
      %v553 = vrcp.pop %v536
      %v554 = vmul.f32 %v536, %v553
      %v555 = vsub.f32 1.0, %v554
      %v556 = vmul.f32 %v553, %v555
      %v557 = vadd.f32 %v553, %v556
      %vm558 = vweird.f32 %v536
      %vm559 = vweird.f32 %v553
      %vm560 = vmor %vm558, %vm559
      %v561 = vsel %vm560, %v553, %v557
      %v562 = vand.u32 2147483647, %v536
      %vm563 = vcmp.eq.f32.partialorder %v562, 8.507059e+37
      %v564 = vand.u32 %v536, 2147483648
      %v565 = vor.u32 1.1754944e-38, %v564
      %v566 = vsel %vm563, %v565, %v561
      %v567 = vmul.f32 %v477, %v566
      %v568 = vrcp.pop %v541
      %v569 = vmul.f32 %v541, %v568
      %v570 = vsub.f32 1.0, %v569
      %v571 = vmul.f32 %v568, %v570
      %v572 = vadd.f32 %v568, %v571
      %vm573 = vweird.f32 %v541
      %vm574 = vweird.f32 %v568
      %vm575 = vmor %vm573, %vm574
      %v576 = vsel %vm575, %v568, %v572
      %v577 = vand.u32 2147483647, %v541
      %vm578 = vcmp.eq.f32.partialorder %v577, 8.507059e+37
      %v579 = vand.u32 %v541, 2147483648
      %v580 = vor.u32 1.1754944e-38, %v579
      %v581 = vsel %vm578, %v580, %v576
      %v582 = vmul.f32 %v478, %v581
      %v583 = vrcp.pop %v546
      %v584 = vmul.f32 %v546, %v583
      %v585 = vsub.f32 1.0, %v584
      %v586 = vmul.f32 %v583, %v585
      %v587 = vadd.f32 %v583, %v586
      %vm588 = vweird.f32 %v546
      %vm589 = vweird.f32 %v583
      %vm590 = vmor %vm588, %vm589
      %v591 = vsel %vm590, %v583, %v587
      %v592 = vand.u32 2147483647, %v546
      %vm593 = vcmp.eq.f32.partialorder %v592, 8.507059e+37
      %v594 = vand.u32 %v546, 2147483648
      %v595 = vor.u32 1.1754944e-38, %v594
      %v596 = vsel %vm593, %v595, %v591
      %v597 = vmul.f32 %v479, %v596
      %v598 = vrcp.pop %v551
      %v599 = vmul.f32 %v551, %v598
      %v600 = vsub.f32 1.0, %v599
      %v601 = vmul.f32 %v598, %v600
      %v602 = vadd.f32 %v598, %v601
      %vm603 = vweird.f32 %v551
      %vm604 = vweird.f32 %v598
      %vm605 = vmor %vm603, %vm604
      %v606 = vsel %vm605, %v598, %v602
      %v607 = vand.u32 2147483647, %v551
      %vm608 = vcmp.eq.f32.partialorder %v607, 8.507059e+37
      %v609 = vand.u32 %v551, 2147483648
      %v610 = vor.u32 1.1754944e-38, %v609
      %v611 = vsel %vm608, %v610, %v606
      %v612 = vmul.f32 %v480, %v611
      %v613 = vld [vmem:[%s1] sm:$0x1]
      %v615 = vperm.slane %v613, 0
      %v617 = vmul.f32 %v567, %v615
      %v618 = vmul.f32 %v582, %v615
      %v619 = vmul.f32 %v597, %v615
      %v620 = vmul.f32 %v612, %v615
      %v621 = vld [vmem:[%s2] sm:$0x1]
      %v623 = vperm.slane %v621, 0
      %v625 = vadd.f32 %v617, %v623
      %v626 = vadd.f32 %v618, %v623
      %v627 = vadd.f32 %v619, %v623
      %v628 = vadd.f32 %v620, %v623
      %629 = vst.msk [vmem:[%s208] sm:$0xff] %vm247, %v625
      %630 = vst.msk [vmem:[%s208 + $0x8] sm:$0xff] %vm247, %v626
      %631 = vst.msk [vmem:[%s208 + $0x10] sm:$0xff] %vm247, %v627
      %632 = vst.msk [vmem:[%s208 + $0x18] sm:$0xff] %vm247, %v628
      %s633 = smul.u32 4, %s19
      %p634 = scmp.lt.s32.totalorder %s18, 3
      %s635 = scalar_select %p634, %s18, 3
      %p636 = scmp.lt.s32.totalorder %s633, 3
      %s637 = scalar_select %p636, %s633, 3
      %s638 = smul.addr %s635, 4
      %s639 = sadd.s32 %s637, %s638
      %s640 = smul.addr %s639, 8
      %s641 = scalar_lea.vmem %s3, %s640
      // Predicated region
      $region37: #{denoiser_forward.7} parent=31 // pred_check
        %p642 = pneg %p116
      $region38: #{denoiser_forward.7} parent=31 // pred_check_branch
        %644 = sbr.rel (%p642) target = $region40
      $region39: #{denoiser_forward.7} parent=31 // pred_region
        %s645 = smul.u32 4, %s19
      $region40: #{denoiser_forward.7} parent=31 // pred_fallthru
        _
    $region32: #{denoiser_forward.7} parent=5 // pred_fallthru
      _
    %p646 = scmp.le.s32.totalorder 2, %s9
    // Predicated region
    $region41: #{denoiser_forward.7} parent=5 // pred_check
      %p647 = pneg %p646
    $region42: #{denoiser_forward.7} parent=5 // pred_check_branch
      %649 = sbr.rel (%p647) target = $region44
    $region43: #{denoiser_forward.7} parent=5 // pred_region
      %s650 = ssub.s32 %s9, 2
      // Predicated region
      $region45: #{denoiser_forward.7} parent=43 // pred_check
        %p651 = pneg %p122
      $region46: #{denoiser_forward.7} parent=43 // pred_check_branch
        %653 = sbr.rel (%p651) target = $region48
      $region47: #{denoiser_forward.7} parent=43 // pred_region
        %s654 = smul.u32 4, %s21
        %p655 = scmp.lt.s32.totalorder %s20, 3
        %s656 = scalar_select %p655, %s20, 3
        %p657 = scmp.lt.s32.totalorder %s654, 3
        %s658 = scalar_select %p657, %s654, 3
        %s659 = smul.addr %s656, 4
        %s660 = sadd.s32 %s658, %s659
        %s661 = smul.addr %s660, 8
        %s662 = scalar_lea.vmem %s3, %s661
      $region48: #{denoiser_forward.7} parent=43 // pred_fallthru
        _
    $region44: #{denoiser_forward.7} parent=5 // pred_fallthru
      _
  $region6: #{denoiser_forward.7} parent=0 // loop_footer
    %s13 = sadd.s32 1, %s9
  $region7: #{denoiser_forward.7} parent=0 // loop_footer_branch
    %8 = sbr.rel target = $region3
  $region8: #{denoiser_forward.7} parent=0 // loop_exit
    _

// kernel: denoiser_forward.9
$region0: #{denoiser_forward.9}
  #allocation0 [shape = 'u32[]', space=smem, size = 0x4, offset = 0x4, fixed_abs, tag = 'smem constant byte address 0x4 - core index']
  #allocation1 [shape = 'u32[72,128]{1,0:T(1,128)}', space=vmem, size = 0x9000, scoped, tag = 'internal scratch']
  #allocation2 [shape = 'f32[1]{0:T(128)S(6)}', space=smem, size = 0x200, scoped, tag = 'scoped memory for denoiser_forward.9']
  %s0 = inlined_call_operand.<no memory space> [shape: f32[1], index: 0, kind: input, shape index: {}]
  %s1 = inlined_call_operand.vmem [shape: f32[72,8], index: 1, kind: input, shape index: {}]
  %s2 = inlined_call_operand.vmem [shape: f32[8,16], index: 2, kind: input, shape index: {}]
  %s3 = inlined_call_operand.vmem [shape: f32[1,16], index: 3, kind: input, shape index: {}]
  %s4 = inlined_call_operand.vmem [shape: f32[72,8], index: 4, kind: output, shape index: {}]
  %s5 = sld [smem:[#allocation0]]
  $region26: #{denoiser_forward.9} parent=0
    _
  %s7 = ssub.s32 1, %s5
  %s8 = scalar_select 0, %s7, %s5
  %9 = sst [smem:[#allocation2]] %s0
  // Predicated region
  $region2: #{denoiser_forward.9} parent=0 // pred_check
    _
  $region3: #{denoiser_forward.9} parent=0 // pred_check_branch
    %11 = sbr.rel (0) target = $region5
  $region4: #{denoiser_forward.9} parent=0 // pred_region
    _
  $region5: #{denoiser_forward.9} parent=0 // pred_fallthru
    _
  // Predicated region
  $region6: #{denoiser_forward.9} parent=0 // pred_check
    _
  $region7: #{denoiser_forward.9} parent=0 // pred_check_branch
    %13 = sbr.rel (0) target = $region9
  $region8: #{denoiser_forward.9} parent=0 // pred_region
    _
  $region9: #{denoiser_forward.9} parent=0 // pred_fallthru
    _
  // Predicated region
  $region10: #{denoiser_forward.9} parent=0 // pred_check
    _
  $region11: #{denoiser_forward.9} parent=0 // pred_check_branch
    %15 = sbr.rel (0) target = $region13
  $region12: #{denoiser_forward.9} parent=0 // pred_region
    _
  $region13: #{denoiser_forward.9} parent=0 // pred_fallthru
    _
  // Predicated region
  $region14: #{denoiser_forward.9} parent=0 // pred_check
    _
  $region15: #{denoiser_forward.9} parent=0 // pred_check_branch
    %17 = sbr.rel (0) target = $region17
  $region16: #{denoiser_forward.9} parent=0 // pred_region
    _
  $region17: #{denoiser_forward.9} parent=0 // pred_fallthru
    _
  %v18 = vld [vmem:[%s1] sm:$0xff]
  %v19 = vld [vmem:[%s1 + $0x8] sm:$0xff]
  %v20 = vld [vmem:[%s1 + $0x10] sm:$0xff]
  %v21 = vld [vmem:[%s1 + $0x18] sm:$0xff]
  %v22 = vld [vmem:[%s1 + $0x20] sm:$0xff]
  %v23 = vld [vmem:[%s1 + $0x28] sm:$0xff]
  %v24 = vld [vmem:[%s1 + $0x30] sm:$0xff]
  %v25 = vld [vmem:[%s1 + $0x38] sm:$0xff]
  %v26 = vld [vmem:[%s1 + $0x40] sm:$0xff]
  %s27 = sld [smem:[#allocation2]]
  %vm28 = vcmp.ge.f32.partialorder %v18, 0.0
  %vm29 = vcmp.ge.f32.partialorder %v19, 0.0
  %vm30 = vcmp.ge.f32.partialorder %v20, 0.0
  %vm31 = vcmp.ge.f32.partialorder %v21, 0.0
  %vm32 = vcmp.ge.f32.partialorder %v22, 0.0
  %vm33 = vcmp.ge.f32.partialorder %v23, 0.0
  %vm34 = vcmp.ge.f32.partialorder %v24, 0.0
  %vm35 = vcmp.ge.f32.partialorder %v25, 0.0
  %vm36 = vcmp.ge.f32.partialorder %v26, 0.0
  %v37 = vstv %s27
  %v38 = vmul.f32 %v37, %v18
  %v39 = vmul.f32 %v37, %v19
  %v40 = vmul.f32 %v37, %v20
  %v41 = vmul.f32 %v37, %v21
  %v42 = vmul.f32 %v37, %v22
  %v43 = vmul.f32 %v37, %v23
  %v44 = vmul.f32 %v37, %v24
  %v45 = vmul.f32 %v37, %v25
  %v46 = vmul.f32 %v37, %v26
  %v47 = vsel %vm28, %v18, %v38
  %v48 = vsel %vm29, %v19, %v39
  %v49 = vsel %vm30, %v20, %v40
  %v50 = vsel %vm31, %v21, %v41
  %v51 = vsel %vm32, %v22, %v42
  %v52 = vsel %vm33, %v23, %v43
  %v53 = vsel %vm34, %v24, %v44
  %v54 = vsel %vm35, %v25, %v45
  %v55 = vsel %vm36, %v26, %v46
  %v56 = vld [vmem:[%s2] sm:$0xff]
  %v57 = vld [vmem:[%s3] sm:$0x1]
  %v59 = vperm.slane %v57, 0
  %vm61 = vcmask 64512
  %v63 = vsel %vm61, %v47, 0
  %v66 = vsel %vm61, %v48, 0
  %v69 = vsel %vm61, %v49, 0
  %v72 = vsel %vm61, %v50, 0
  %v75 = vsel %vm61, %v51, 0
  %v78 = vsel %vm61, %v52, 0
  %v81 = vsel %vm61, %v53, 0
  %v84 = vsel %vm61, %v54, 0
  %v87 = vsel %vm61, %v55, 0
  %89 = vmatpush.msra.mxu0 0.0
  %90 = vmatpush.msra.mxu0 0.0
  %91 = vmatpush.msra.mxu0 0.0
  %92 = vmatpush.msra.mxu0 0.0
  %93 = vmatpush.msra.mxu0 0.0
  %94 = vmatpush.msra.mxu0 0.0
  %95 = vmatpush.msra.mxu0 0.0
  %96 = vmatpush.msra.mxu0 0.0
  %97 = vmatpush.msra.mxu0 0.0
  %98 = vmatpush.msra.mxu0 0.0
  %99 = vmatpush.msra.mxu0 0.0
  %100 = vmatpush.msra.mxu0 0.0
  %101 = vmatpush.msra.mxu0 0.0
  %102 = vmatpush.msra.mxu0 0.0
  %103 = vmatpush.msra.mxu0 0.0
  %104 = vmatpush.msra.mxu0 %v56
  %105 = vmatmul.f32.gmra.mxu0 %v63
  %v106 = vpop.f32.mrf.mxu0
  %v107 = vadd.f32 %v59, %v106
  %108 = vmatmul.f32.gmra.mxu0 %v66
  %v109 = vpop.f32.mrf.mxu0
  %v110 = vadd.f32 %v59, %v109
  %111 = vmatmul.f32.gmra.mxu0 %v69
  %v112 = vpop.f32.mrf.mxu0
  %v113 = vadd.f32 %v59, %v112
  %114 = vmatmul.f32.gmra.mxu0 %v72
  %v115 = vpop.f32.mrf.mxu0
  %v116 = vadd.f32 %v59, %v115
  %117 = vmatmul.f32.gmra.mxu0 %v75
  %v118 = vpop.f32.mrf.mxu0
  %v119 = vadd.f32 %v59, %v118
  %120 = vmatmul.f32.gmra.mxu0 %v78
  %v121 = vpop.f32.mrf.mxu0
  %v122 = vadd.f32 %v59, %v121
  %123 = vmatmul.f32.gmra.mxu0 %v81
  %v124 = vpop.f32.mrf.mxu0
  %v125 = vadd.f32 %v59, %v124
  %126 = vmatmul.f32.gmra.mxu0 %v84
  %v127 = vpop.f32.mrf.mxu0
  %v128 = vadd.f32 %v59, %v127
  %129 = vmatmul.f32.gmra.mxu0 %v87
  %v130 = vpop.f32.mrf.mxu0
  %v131 = vadd.f32 %v59, %v130
  %132 = vdwg.mxu0
  %v133 = vtanh.pop %v107
  %v134 = vtanh.pop %v110
  %v135 = vtanh.pop %v113
  %v136 = vtanh.pop %v116
  %v137 = vtanh.pop %v119
  %v138 = vtanh.pop %v122
  %v139 = vtanh.pop %v125
  %v140 = vtanh.pop %v128
  %v141 = vtanh.pop %v131
  %v142 = vxor.u32 %v107, 2147483648
  %v143 = vxor.u32 %v110, 2147483648
  %v144 = vxor.u32 %v113, 2147483648
  %v145 = vxor.u32 %v116, 2147483648
  %v146 = vxor.u32 %v119, 2147483648
  %v147 = vxor.u32 %v122, 2147483648
  %v148 = vxor.u32 %v125, 2147483648
  %v149 = vxor.u32 %v128, 2147483648
  %v150 = vxor.u32 %v131, 2147483648
  %v151 = vmul.f32 %v142, 1.442695
  %v152 = vpow.pop %v151
  %v153 = vmul.f32 %v143, 1.442695
  %v154 = vpow.pop %v153
  %v155 = vmul.f32 %v144, 1.442695
  %v156 = vpow.pop %v155
  %v157 = vmul.f32 %v145, 1.442695
  %v158 = vpow.pop %v157
  %v159 = vmul.f32 %v146, 1.442695
  %v160 = vpow.pop %v159
  %v161 = vmul.f32 %v147, 1.442695
  %v162 = vpow.pop %v161
  %v163 = vmul.f32 %v148, 1.442695
  %v164 = vpow.pop %v163
  %v165 = vmul.f32 %v149, 1.442695
  %v166 = vpow.pop %v165
  %v167 = vmul.f32 %v150, 1.442695
  %v168 = vpow.pop %v167
  %v169 = vadd.f32 %v152, 1.0
  %v170 = vadd.f32 %v154, 1.0
  %v171 = vadd.f32 %v156, 1.0
  %v172 = vadd.f32 %v158, 1.0
  %v173 = vadd.f32 %v160, 1.0
  %v174 = vadd.f32 %v162, 1.0
  %v175 = vadd.f32 %v164, 1.0
  %v176 = vadd.f32 %v166, 1.0
  %v177 = vadd.f32 %v168, 1.0
  %v178 = vrcp.pop %v169
  %v179 = vmul.f32 %v169, %v178
  %v180 = vsub.f32 1.0, %v179
  %v181 = vmul.f32 %v178, %v180
  %v182 = vadd.f32 %v178, %v181
  %vm183 = vweird.f32 %v169
  %vm184 = vweird.f32 %v178
  %vm185 = vmor %vm183, %vm184
  %v186 = vsel %vm185, %v178, %v182
  %v187 = vand.u32 2147483647, %v169
  %vm188 = vcmp.eq.f32.partialorder %v187, 8.507059e+37
  %v189 = vand.u32 %v169, 2147483648
  %v190 = vor.u32 1.1754944e-38, %v189
  %v191 = vsel %vm188, %v190, %v186
  %v192 = vmul.f32 1.0, %v191
  %v193 = vrcp.pop %v170
  %v194 = vmul.f32 %v170, %v193
  %v195 = vsub.f32 1.0, %v194
  %v196 = vmul.f32 %v193, %v195
  %v197 = vadd.f32 %v193, %v196
  %vm198 = vweird.f32 %v170
  %vm199 = vweird.f32 %v193
  %vm200 = vmor %vm198, %vm199
  %v201 = vsel %vm200, %v193, %v197
  %v202 = vand.u32 2147483647, %v170
  %vm203 = vcmp.eq.f32.partialorder %v202, 8.507059e+37
  %v204 = vand.u32 %v170, 2147483648
  %v205 = vor.u32 1.1754944e-38, %v204
  %v206 = vsel %vm203, %v205, %v201
  %v207 = vmul.f32 1.0, %v206
  %v208 = vrcp.pop %v171
  %v209 = vmul.f32 %v171, %v208
  %v210 = vsub.f32 1.0, %v209
  %v211 = vmul.f32 %v208, %v210
  %v212 = vadd.f32 %v208, %v211
  %vm213 = vweird.f32 %v171
  %vm214 = vweird.f32 %v208
  %vm215 = vmor %vm213, %vm214
  %v216 = vsel %vm215, %v208, %v212
  %v217 = vand.u32 2147483647, %v171
  %vm218 = vcmp.eq.f32.partialorder %v217, 8.507059e+37
  %v219 = vand.u32 %v171, 2147483648
  %v220 = vor.u32 1.1754944e-38, %v219
  %v221 = vsel %vm218, %v220, %v216
  %v222 = vmul.f32 1.0, %v221
  %v223 = vrcp.pop %v172
  %v224 = vmul.f32 %v172, %v223
  %v225 = vsub.f32 1.0, %v224
  %v226 = vmul.f32 %v223, %v225
  %v227 = vadd.f32 %v223, %v226
  %vm228 = vweird.f32 %v172
  %vm229 = vweird.f32 %v223
  %vm230 = vmor %vm228, %vm229
  %v231 = vsel %vm230, %v223, %v227
  %v232 = vand.u32 2147483647, %v172
  %vm233 = vcmp.eq.f32.partialorder %v232, 8.507059e+37
  %v234 = vand.u32 %v172, 2147483648
  %v235 = vor.u32 1.1754944e-38, %v234
  %v236 = vsel %vm233, %v235, %v231
  %v237 = vmul.f32 1.0, %v236
  %v238 = vrcp.pop %v173
  %v239 = vmul.f32 %v173, %v238
  %v240 = vsub.f32 1.0, %v239
  %v241 = vmul.f32 %v238, %v240
  %v242 = vadd.f32 %v238, %v241
  %vm243 = vweird.f32 %v173
  %vm244 = vweird.f32 %v238
  %vm245 = vmor %vm243, %vm244
  %v246 = vsel %vm245, %v238, %v242
  %v247 = vand.u32 2147483647, %v173
  %vm248 = vcmp.eq.f32.partialorder %v247, 8.507059e+37
  %v249 = vand.u32 %v173, 2147483648
  %v250 = vor.u32 1.1754944e-38, %v249
  %v251 = vsel %vm248, %v250, %v246
  %v252 = vmul.f32 1.0, %v251
  %v253 = vrcp.pop %v174
  %v254 = vmul.f32 %v174, %v253
  %v255 = vsub.f32 1.0, %v254
  %v256 = vmul.f32 %v253, %v255
  %v257 = vadd.f32 %v253, %v256
  %vm258 = vweird.f32 %v174
  %vm259 = vweird.f32 %v253
  %vm260 = vmor %vm258, %vm259
  %v261 = vsel %vm260, %v253, %v257
  %v262 = vand.u32 2147483647, %v174
  %vm263 = vcmp.eq.f32.partialorder %v262, 8.507059e+37
  %v264 = vand.u32 %v174, 2147483648
  %v265 = vor.u32 1.1754944e-38, %v264
  %v266 = vsel %vm263, %v265, %v261
  %v267 = vmul.f32 1.0, %v266
  %v268 = vrcp.pop %v175
  %v269 = vmul.f32 %v175, %v268
  %v270 = vsub.f32 1.0, %v269
  %v271 = vmul.f32 %v268, %v270
  %v272 = vadd.f32 %v268, %v271
  %vm273 = vweird.f32 %v175
  %vm274 = vweird.f32 %v268
  %vm275 = vmor %vm273, %vm274
  %v276 = vsel %vm275, %v268, %v272
  %v277 = vand.u32 2147483647, %v175
  %vm278 = vcmp.eq.f32.partialorder %v277, 8.507059e+37
  %v279 = vand.u32 %v175, 2147483648
  %v280 = vor.u32 1.1754944e-38, %v279
  %v281 = vsel %vm278, %v280, %v276
  %v282 = vmul.f32 1.0, %v281
  %v283 = vrcp.pop %v176
  %v284 = vmul.f32 %v176, %v283
  %v285 = vsub.f32 1.0, %v284
  %v286 = vmul.f32 %v283, %v285
  %v287 = vadd.f32 %v283, %v286
  %vm288 = vweird.f32 %v176
  %vm289 = vweird.f32 %v283
  %vm290 = vmor %vm288, %vm289
  %v291 = vsel %vm290, %v283, %v287
  %v292 = vand.u32 2147483647, %v176
  %vm293 = vcmp.eq.f32.partialorder %v292, 8.507059e+37
  %v294 = vand.u32 %v176, 2147483648
  %v295 = vor.u32 1.1754944e-38, %v294
  %v296 = vsel %vm293, %v295, %v291
  %v297 = vmul.f32 1.0, %v296
  %v298 = vrcp.pop %v177
  %v299 = vmul.f32 %v177, %v298
  %v300 = vsub.f32 1.0, %v299
  %v301 = vmul.f32 %v298, %v300
  %v302 = vadd.f32 %v298, %v301
  %vm303 = vweird.f32 %v177
  %vm304 = vweird.f32 %v298
  %vm305 = vmor %vm303, %vm304
  %v306 = vsel %vm305, %v298, %v302
  %v307 = vand.u32 2147483647, %v177
  %vm308 = vcmp.eq.f32.partialorder %v307, 8.507059e+37
  %v309 = vand.u32 %v177, 2147483648
  %v310 = vor.u32 1.1754944e-38, %v309
  %v311 = vsel %vm308, %v310, %v306
  %v312 = vmul.f32 1.0, %v311
  %322 = vrot.lane.b32.xlu0 %v192, 120
  %v323 = vpop.permute.xlu0 %322
  %324 = vrot.lane.b32.xlu0 %v207, 120
  %v325 = vpop.permute.xlu0 %324
  %326 = vrot.lane.b32.xlu0 %v222, 120
  %v327 = vpop.permute.xlu0 %326
  %328 = vrot.lane.b32.xlu0 %v237, 120
  %v329 = vpop.permute.xlu0 %328
  %330 = vrot.lane.b32.xlu0 %v252, 120
  %v331 = vpop.permute.xlu0 %330
  %332 = vrot.lane.b32.xlu0 %v267, 120
  %v333 = vpop.permute.xlu0 %332
  %334 = vrot.lane.b32.xlu0 %v282, 120
  %v335 = vpop.permute.xlu0 %334
  %336 = vrot.lane.b32.xlu0 %v297, 120
  %v337 = vpop.permute.xlu0 %336
  %338 = vrot.lane.b32.xlu0 %v312, 120
  %v339 = vpop.permute.xlu0 %338
  %v349 = vmul.f32 %v133, %v323
  %v350 = vmul.f32 %v134, %v325
  %v351 = vmul.f32 %v135, %v327
  %v352 = vmul.f32 %v136, %v329
  %v353 = vmul.f32 %v137, %v331
  %v354 = vmul.f32 %v138, %v333
  %v355 = vmul.f32 %v139, %v335
  %v356 = vmul.f32 %v140, %v337
  %v357 = vmul.f32 %v141, %v339
  %v358 = vmax.f32 %v349, 0.0
  %v359 = vmax.f32 %v350, 0.0
  %v360 = vmax.f32 %v351, 0.0
  %v361 = vmax.f32 %v352, 0.0
  %v362 = vmax.f32 %v353, 0.0
  %v363 = vmax.f32 %v354, 0.0
  %v364 = vmax.f32 %v355, 0.0
  %v365 = vmax.f32 %v356, 0.0
  %v366 = vmax.f32 %v357, 0.0
  %367 = vst.msk [vmem:[%s4] sm:$0xff] %vm61, %v358
  %368 = vst.msk [vmem:[%s4 + $0x8] sm:$0xff] %vm61, %v359
  %369 = vst.msk [vmem:[%s4 + $0x10] sm:$0xff] %vm61, %v360
  %370 = vst.msk [vmem:[%s4 + $0x18] sm:$0xff] %vm61, %v361
  %371 = vst.msk [vmem:[%s4 + $0x20] sm:$0xff] %vm61, %v362
  %372 = vst.msk [vmem:[%s4 + $0x28] sm:$0xff] %vm61, %v363
  %373 = vst.msk [vmem:[%s4 + $0x30] sm:$0xff] %vm61, %v364
  %374 = vst.msk [vmem:[%s4 + $0x38] sm:$0xff] %vm61, %v365
  %375 = vst.msk [vmem:[%s4 + $0x40] sm:$0xff] %vm61, %v366
  // Predicated region
  $region18: #{denoiser_forward.9} parent=0 // pred_check
    _
  $region19: #{denoiser_forward.9} parent=0 // pred_check_branch
    %377 = sbr.rel (0) target = $region21
  $region20: #{denoiser_forward.9} parent=0 // pred_region
    _
  $region21: #{denoiser_forward.9} parent=0 // pred_fallthru
    _
  // Predicated region
  $region22: #{denoiser_forward.9} parent=0 // pred_check
    _
  $region23: #{denoiser_forward.9} parent=0 // pred_check_branch
    %379 = sbr.rel (0) target = $region25
  $region24: #{denoiser_forward.9} parent=0 // pred_region
    _
  $region25: #{denoiser_forward.9} parent=0 // pred_fallthru
    _

</llo_original>
